<compile_context>
chip_gen: v6e
topology: v6e:2x2x1
jax: 0.10.0
libtpu: 0.0.40
codegen_flags: <defaults>
</compile_context>

<pallas_src>
import math

import jax
import jax.numpy as jnp
from jax.experimental import pallas as pl
from jax.experimental.pallas import tpu as pltpu


# --------------------------------------------------------------------------- #
# Kernel: the entire forward in one invocation (all refs fully VMEM-resident). #
# --------------------------------------------------------------------------- #
def _toplogynet_kernel(
    bc_ref, cf_ref, fp_ref,
    w_in0_ref, b_in0_ref, ws0_ref, bs0_ref,      # Feature fc1_0 (BN folded)
    w_in1_ref, b_in1_ref, ws1_ref, bs1_ref,      # Feature fc1_1
    w_in2_ref, b_in2_ref, ws2_ref, bs2_ref,      # Feature fc1_2
    w2a_ref, w2b_ref, w2c_ref, b_in3_ref, ws3_ref, bs3_ref,   # Feature fc2
    a_hat_ref, gw1_ref, gb1_ref, gw2_ref, gb2_ref,             # GIN layers
    pool_ref, w3_ref, b3_ref,                                  # mean-pool + fc3
    o_ref,
):
    f32 = jnp.float32

    def residual_stack(h, ws_ref, bs_ref):
        # L x [relu(h @ W_eff + b_eff) + h]  (BN folded, dropout = identity)
        for l in range(ws_ref.shape[0]):
            y = jnp.dot(h, ws_ref[l], preferred_element_type=f32) + bs_ref[l]
            h = jnp.maximum(y, 0.0) + h
        return h

    def feature(x, w_in_ref, b_in_ref, ws_ref, bs_ref):
        h = jnp.dot(x, w_in_ref[...], preferred_element_type=f32) + b_in_ref[...]
        return residual_stack(h, ws_ref, bs_ref)

    f1 = feature(bc_ref[...], w_in0_ref, b_in0_ref, ws0_ref, bs0_ref)
    f2 = feature(cf_ref[...], w_in1_ref, b_in1_ref, ws1_ref, bs1_ref)
    f3 = feature(fp_ref[...], w_in2_ref, b_in2_ref, ws2_ref, bs2_ref)

    # fc2.in_layer applied to concat([f1, f2, f3]) == sum of three (N,H)@(H,H).
    h = (jnp.dot(f1, w2a_ref[...], preferred_element_type=f32)
         + jnp.dot(f2, w2b_ref[...], preferred_element_type=f32)
         + jnp.dot(f3, w2c_ref[...], preferred_element_type=f32)
         + b_in3_ref[...])
    h = residual_stack(h, ws3_ref, bs3_ref)

    # TODO(synk): GIN comes from torch_geometric (not included in the spec);
    # implemented as the standard GINConv: MLP((1+eps)*h + sum_neighbors(h))
    # with MLP = Lin -> BN -> ReLU -> Lin (BN folded), eps=0 (PyG default).
    for g in range(gw1_ref.shape[0]):
        agg = jnp.dot(a_hat_ref[g], h, preferred_element_type=f32)
        y = jnp.maximum(
            jnp.dot(agg, gw1_ref[g], preferred_element_type=f32) + gb1_ref[g], 0.0)
        y = jnp.dot(y, gw2_ref[g], preferred_element_type=f32) + gb2_ref[g]
        h = y + h

    pooled = jnp.dot(pool_ref[...], h, preferred_element_type=f32)   # global_mean_pool
    o_ref[...] = (jnp.dot(pooled, w3_ref[...], preferred_element_type=f32)
                  + b3_ref[...]).astype(o_ref.dtype)


# --------------------------------------------------------------------------- #
# Wrapper: weight prep (BN folding), graph glue, single pallas_call.          #
# --------------------------------------------------------------------------- #
def _fold_bn(w, b, gamma, beta, mean, var, eps=1e-5):
    """Fold eval-mode BatchNorm1d into the preceding Linear (x @ W + b)."""
    scale = gamma / jnp.sqrt(var + eps)
    return w * scale[None, :], (b - mean) * scale + beta


def _prep_feature(p):
    ws, bs = [], []
    for lp in p["layers"]:
        w_eff, b_eff = _fold_bn(lp["w"], lp["b"], lp["gamma"], lp["beta"],
                                lp["mean"], lp["var"])
        ws.append(w_eff)
        bs.append(b_eff.reshape(1, -1))
    return (p["w_in"], p["b_in"].reshape(1, -1), jnp.stack(ws), jnp.stack(bs))


def toplogynet_forward(x, edge_index, batch, params, *, feat_dim, num_classes,
                       num_graphs):
    N = x.shape[0]
    H = params["fc1_0"]["w_in"].shape[1]
    C = num_classes

    # glue: mirrors data.x[:, ...] slicing in the PyTorch forward
    bc = x[:, :feat_dim]
    cf = x[:, feat_dim:-1024]
    fp = x[:, -1024:]

    # weight prep: fold BN into Linears
    w_in0, b_in0, ws0, bs0 = _prep_feature(params["fc1_0"])
    w_in1, b_in1, ws1, bs1 = _prep_feature(params["fc1_1"])
    w_in2, b_in2, ws2, bs2 = _prep_feature(params["fc1_2"])
    w_in3, b_in3, ws3, bs3 = _prep_feature(params["fc2"])
    w2a, w2b, w2c = w_in3[:H], w_in3[H:2 * H], w_in3[2 * H:]

    # graph glue: dense neighbour-sum and mean-pool operators
    src, dst = edge_index[0], edge_index[1]
    adj = jnp.zeros((N, N), jnp.float32).at[dst, src].add(1.0)
    eye = jnp.eye(N, dtype=jnp.float32)
    a_hat = jnp.stack([adj + (1.0 + gp["eps"]) * eye for gp in params["gin"]])

    gw1, gb1, gw2, gb2 = [], [], [], []
    for gp in params["gin"]:
        w1_eff, b1_eff = _fold_bn(gp["w1"], gp["b1"], gp["gamma"], gp["beta"],
                                  gp["mean"], gp["var"])
        gw1.append(w1_eff)
        gb1.append(b1_eff.reshape(1, -1))
        gw2.append(gp["w2"])
        gb2.append(gp["b2"].reshape(1, -1))
    gw1, gb1, gw2, gb2 = map(jnp.stack, (gw1, gb1, gw2, gb2))

    onehot = (batch[None, :] == jnp.arange(num_graphs)[:, None]).astype(jnp.float32)
    pool = onehot / jnp.maximum(onehot.sum(axis=1, keepdims=True), 1.0)

    w3, b3 = params["w3"], params["b3"].reshape(1, -1)

    args = (bc, cf, fp,
            w_in0, b_in0, ws0, bs0,
            w_in1, b_in1, ws1, bs1,
            w_in2, b_in2, ws2, bs2,
            w2a, w2b, w2c, b_in3, ws3, bs3,
            a_hat, gw1, gb1, gw2, gb2,
            pool, w3, b3)

    # advisory cost estimate for XLA scheduling around the tiny custom call
    L, G = int(ws0.shape[0]), int(gw1.shape[0])
    flops = 2 * N * H * (bc.shape[1] + cf.shape[1] + fp.shape[1] + 3 * H)
    flops += 4 * L * 2 * N * H * H
    flops += G * (2 * N * N * H + 2 * 2 * N * H * H)
    flops += 2 * num_graphs * N * H + 2 * num_graphs * H * C
    bytes_accessed = sum(int(a.size) * 4 for a in args) + num_graphs * C * 4

    out = pl.pallas_call(
        _toplogynet_kernel,
        out_shape=jax.ShapeDtypeStruct((num_graphs, C), jnp.float32),
        in_specs=[pl.BlockSpec(memory_space=pltpu.MemorySpace.VMEM)] * len(args),
        out_specs=pl.BlockSpec(memory_space=pltpu.MemorySpace.VMEM),
        cost_estimate=pl.CostEstimate(flops=flops, transcendentals=0,
                                      bytes_accessed=bytes_accessed),
    )(*args)

    return out.reshape(-1) if C == 1 else out


# --------------------------------------------------------------------------- #
# Pure-JAX reference (unfolded BN, segment ops) to validate the kernel.        #
# --------------------------------------------------------------------------- #
def toplogynet_reference(x, edge_index, batch, params, *, feat_dim, num_classes,
                         num_graphs):
    def bn_eval(y, gamma, beta, mean, var, eps=1e-5):
        return (y - mean) / jnp.sqrt(var + eps) * gamma + beta

    def feature(h, p):
        h = h @ p["w_in"] + p["b_in"]
        for lp in p["layers"]:
            y = bn_eval(h @ lp["w"] + lp["b"], lp["gamma"], lp["beta"],
                        lp["mean"], lp["var"])
            h = jax.nn.relu(y) + h
        return h

    bc, cf, fp = x[:, :feat_dim], x[:, feat_dim:-1024], x[:, -1024:]
    f1 = feature(bc, params["fc1_0"])
    f2 = feature(cf, params["fc1_1"])
    f3 = feature(fp, params["fc1_2"])
    h = feature(jnp.concatenate([f1, f2, f3], axis=-1), params["fc2"])

    src, dst = edge_index[0], edge_index[1]
    N = x.shape[0]
    for gp in params["gin"]:
        agg = (1.0 + gp["eps"]) * h + jax.ops.segment_sum(h[src], dst,
                                                          num_segments=N)
        y = jax.nn.relu(bn_eval(agg @ gp["w1"] + gp["b1"], gp["gamma"],
                                gp["beta"], gp["mean"], gp["var"]))
        y = y @ gp["w2"] + gp["b2"]
        h = y + h

    sums = jax.ops.segment_sum(h, batch, num_segments=num_graphs)
    cnts = jax.ops.segment_sum(jnp.ones((N,), jnp.float32), batch,
                               num_segments=num_graphs)
    pooled = sums / cnts[:, None]
    out = pooled @ params["w3"] + params["b3"]
    return out.reshape(-1) if num_classes == 1 else out


# --------------------------------------------------------------------------- #
# Deterministic parameter / data construction.                                 #
# --------------------------------------------------------------------------- #
def _linear_init(key, fan_in, fan_out):
    kw, kb = jax.random.split(key)
    bound = 1.0 / math.sqrt(fan_in)
    w = jax.random.uniform(kw, (fan_in, fan_out), jnp.float32, -bound, bound)
    b = jax.random.uniform(kb, (fan_out,), jnp.float32, -bound, bound)
    return w, b


def _bn_init(key, dim):
    k1, k2, k3, k4 = jax.random.split(key, 4)
    return dict(
        gamma=jax.random.uniform(k1, (dim,), jnp.float32, 0.5, 1.5),
        beta=jax.random.uniform(k2, (dim,), jnp.float32, -0.5, 0.5),
        mean=jax.random.uniform(k3, (dim,), jnp.float32, -0.5, 0.5),
        var=jax.random.uniform(k4, (dim,), jnp.float32, 0.5, 1.5),
    )


def _feature_init(key, in_dim, hidden, n_layers):
    keys = jax.random.split(key, n_layers + 1)
    w_in, b_in = _linear_init(keys[0], in_dim, hidden)
    layers = []
    for l in range(n_layers):
        k_lin, k_bn = jax.random.split(keys[l + 1])
        w, b = _linear_init(k_lin, hidden, hidden)
        layers.append(dict(w=w, b=b, **_bn_init(k_bn, hidden)))
    return dict(w_in=w_in, b_in=b_in, layers=layers)


def _gin_init(key, hidden, n_layers):
    gps = []
    for k in jax.random.split(key, n_layers):
        k1, k2, kb = jax.random.split(k, 3)
        w1, b1 = _linear_init(k1, hidden, hidden)
        w2, b2 = _linear_init(k2, hidden, hidden)
        gps.append(dict(eps=0.0, w1=w1, b1=b1, w2=w2, b2=b2,
                        **_bn_init(kb, hidden)))
    return gps


if __name__ == "__main__":
    feat_dim = 30          # input_size
    hidden_dim = 32
    n_fc_layers = 1
    n_gnn_layers = 1
    num_classes = 1
    nodes_per_graph = 8
    num_graphs = 2
    N = nodes_per_graph * num_graphs

    key = jax.random.PRNGKey(0)
    kx, k0, k1, k2, k3, kg, k5 = jax.random.split(key, 7)

    # node features: [bc (feat_dim) | cf (7) | fp (1024)]
    x = jax.random.normal(kx, (N, feat_dim + 7 + 1024), jnp.float32)

    # bidirectional ring graph within each of the two graphs
    src_list, dst_list, batch_list = [], [], []
    for g in range(num_graphs):
        base = g * nodes_per_graph
        for i in range(nodes_per_graph):
            j = (i + 1) % nodes_per_graph
            src_list += [base + i, base + j]
            dst_list += [base + j, base + i]
        batch_list += [g] * nodes_per_graph
    edge_index = jnp.array([src_list, dst_list], jnp.int32)
    batch = jnp.array(batch_list, jnp.int32)

    params = dict(
        fc1_0=_feature_init(k0, feat_dim, hidden_dim, n_fc_layers),
        fc1_1=_feature_init(k1, 7, hidden_dim, n_fc_layers),
        fc1_2=_feature_init(k2, 1024, hidden_dim, n_fc_layers),
        fc2=_feature_init(k3, hidden_dim * 3, hidden_dim, n_fc_layers),
        gin=_gin_init(kg, hidden_dim, n_gnn_layers),
    )
    params["w3"], params["b3"] = _linear_init(k5, hidden_dim, num_classes)

    out = toplogynet_forward(x, edge_index, batch, params,
                             feat_dim=feat_dim, num_classes=num_classes,
                             num_graphs=num_graphs)
    out = jax.block_until_ready(out)

    ref = toplogynet_reference(x, edge_index, batch, params,
                               feat_dim=feat_dim, num_classes=num_classes,
                               num_graphs=num_graphs)

    assert out.shape == (num_graphs,), out.shape
    assert jnp.allclose(out, ref, atol=1e-3, rtol=1e-3), (out, ref)
    print("KERNEL_OK")
</pallas_src>

<mosaic_0001>
module attributes {stable_mosaic.version = 11 : i64} {
  func.func @_toplogynet_kernel(%arg0: memref<16x30xf32, #tpu.memory_space<vmem>>, %arg1: memref<16x7xf32, #tpu.memory_space<vmem>>, %arg2: memref<16x1024xf32, #tpu.memory_space<vmem>>, %arg3: memref<30x32xf32, #tpu.memory_space<vmem>>, %arg4: memref<1x32xf32, #tpu.memory_space<vmem>>, %arg5: memref<1x32x32xf32, #tpu.memory_space<vmem>>, %arg6: memref<1x1x32xf32, #tpu.memory_space<vmem>>, %arg7: memref<7x32xf32, #tpu.memory_space<vmem>>, %arg8: memref<1x32xf32, #tpu.memory_space<vmem>>, %arg9: memref<1x32x32xf32, #tpu.memory_space<vmem>>, %arg10: memref<1x1x32xf32, #tpu.memory_space<vmem>>, %arg11: memref<1024x32xf32, #tpu.memory_space<vmem>>, %arg12: memref<1x32xf32, #tpu.memory_space<vmem>>, %arg13: memref<1x32x32xf32, #tpu.memory_space<vmem>>, %arg14: memref<1x1x32xf32, #tpu.memory_space<vmem>>, %arg15: memref<32x32xf32, #tpu.memory_space<vmem>>, %arg16: memref<32x32xf32, #tpu.memory_space<vmem>>, %arg17: memref<32x32xf32, #tpu.memory_space<vmem>>, %arg18: memref<1x32xf32, #tpu.memory_space<vmem>>, %arg19: memref<1x32x32xf32, #tpu.memory_space<vmem>>, %arg20: memref<1x1x32xf32, #tpu.memory_space<vmem>>, %arg21: memref<1x16x16xf32, #tpu.memory_space<vmem>>, %arg22: memref<1x32x32xf32, #tpu.memory_space<vmem>>, %arg23: memref<1x1x32xf32, #tpu.memory_space<vmem>>, %arg24: memref<1x32x32xf32, #tpu.memory_space<vmem>>, %arg25: memref<1x1x32xf32, #tpu.memory_space<vmem>>, %arg26: memref<2x16xf32, #tpu.memory_space<vmem>>, %arg27: memref<32x1xf32, #tpu.memory_space<vmem>>, %arg28: memref<1x1xf32, #tpu.memory_space<vmem>>, %arg29: memref<2x1xf32, #tpu.memory_space<vmem>>) attributes {dimension_semantics = [], scalar_prefetch = 0 : i64, scratch_operands = 0 : i64, tpu.core_type = #tpu.core_type<tc>} {
    %c0 = arith.constant 0 : index
    %c0_0 = arith.constant 0 : index
    %0 = vector.load %arg0[%c0, %c0_0] : memref<16x30xf32, #tpu.memory_space<vmem>>, vector<16x30xf32>
    %c0_1 = arith.constant 0 : index
    %c0_2 = arith.constant 0 : index
    %1 = vector.load %arg3[%c0_1, %c0_2] : memref<30x32xf32, #tpu.memory_space<vmem>>, vector<30x32xf32>
    %cst = arith.constant dense<0.000000e+00> : vector<16x32xf32>
    %2 = tpu.matmul %0, %1, %cst {dimension_numbers = #tpu.dot_dimension_numbers<[1], [0], [0], [1], [0, 0, 1, 1], [], []>} : vector<16x30xf32>, vector<30x32xf32>, vector<16x32xf32> -> vector<16x32xf32>
    %c0_3 = arith.constant 0 : index
    %c0_4 = arith.constant 0 : index
    %3 = vector.load %arg4[%c0_3, %c0_4] : memref<1x32xf32, #tpu.memory_space<vmem>>, vector<1x32xf32>
    %4 = vector.broadcast %3 : vector<1x32xf32> to vector<16x32xf32>
    %5 = arith.addf %2, %4 : vector<16x32xf32>
    %c0_5 = arith.constant 0 : index
    %c0_6 = arith.constant 0 : index
    %c0_7 = arith.constant 0 : index
    %6 = vector.load %arg5[%c0_5, %c0_6, %c0_7] : memref<1x32x32xf32, #tpu.memory_space<vmem>>, vector<1x32x32xf32>
    %7 = vector.shape_cast %6 : vector<1x32x32xf32> to vector<32x32xf32>
    %cst_8 = arith.constant dense<0.000000e+00> : vector<16x32xf32>
    %8 = tpu.matmul %5, %7, %cst_8 {dimension_numbers = #tpu.dot_dimension_numbers<[1], [0], [0], [1], [0, 0, 1, 1], [], []>} : vector<16x32xf32>, vector<32x32xf32>, vector<16x32xf32> -> vector<16x32xf32>
    %c0_9 = arith.constant 0 : index
    %c0_10 = arith.constant 0 : index
    %c0_11 = arith.constant 0 : index
    %9 = vector.load %arg6[%c0_9, %c0_10, %c0_11] : memref<1x1x32xf32, #tpu.memory_space<vmem>>, vector<1x1x32xf32>
    %10 = vector.shape_cast %9 : vector<1x1x32xf32> to vector<1x32xf32>
    %11 = vector.broadcast %10 : vector<1x32xf32> to vector<16x32xf32>
    %12 = arith.addf %8, %11 : vector<16x32xf32>
    %cst_12 = arith.constant 0.000000e+00 : f32
    %13 = vector.broadcast %cst_12 : f32 to vector<16x32xf32>
    %14 = arith.maximumf %12, %13 : vector<16x32xf32>
    %15 = arith.addf %14, %5 : vector<16x32xf32>
    %c0_13 = arith.constant 0 : index
    %c0_14 = arith.constant 0 : index
    %16 = vector.load %arg1[%c0_13, %c0_14] : memref<16x7xf32, #tpu.memory_space<vmem>>, vector<16x7xf32>
    %c0_15 = arith.constant 0 : index
    %c0_16 = arith.constant 0 : index
    %17 = vector.load %arg7[%c0_15, %c0_16] : memref<7x32xf32, #tpu.memory_space<vmem>>, vector<7x32xf32>
    %cst_17 = arith.constant dense<0.000000e+00> : vector<16x32xf32>
    %18 = tpu.matmul %16, %17, %cst_17 {dimension_numbers = #tpu.dot_dimension_numbers<[1], [0], [0], [1], [0, 0, 1, 1], [], []>} : vector<16x7xf32>, vector<7x32xf32>, vector<16x32xf32> -> vector<16x32xf32>
    %c0_18 = arith.constant 0 : index
    %c0_19 = arith.constant 0 : index
    %19 = vector.load %arg8[%c0_18, %c0_19] : memref<1x32xf32, #tpu.memory_space<vmem>>, vector<1x32xf32>
    %20 = vector.broadcast %19 : vector<1x32xf32> to vector<16x32xf32>
    %21 = arith.addf %18, %20 : vector<16x32xf32>
    %c0_20 = arith.constant 0 : index
    %c0_21 = arith.constant 0 : index
    %c0_22 = arith.constant 0 : index
    %22 = vector.load %arg9[%c0_20, %c0_21, %c0_22] : memref<1x32x32xf32, #tpu.memory_space<vmem>>, vector<1x32x32xf32>
    %23 = vector.shape_cast %22 : vector<1x32x32xf32> to vector<32x32xf32>
    %cst_23 = arith.constant dense<0.000000e+00> : vector<16x32xf32>
    %24 = tpu.matmul %21, %23, %cst_23 {dimension_numbers = #tpu.dot_dimension_numbers<[1], [0], [0], [1], [0, 0, 1, 1], [], []>} : vector<16x32xf32>, vector<32x32xf32>, vector<16x32xf32> -> vector<16x32xf32>
    %c0_24 = arith.constant 0 : index
    %c0_25 = arith.constant 0 : index
    %c0_26 = arith.constant 0 : index
    %25 = vector.load %arg10[%c0_24, %c0_25, %c0_26] : memref<1x1x32xf32, #tpu.memory_space<vmem>>, vector<1x1x32xf32>
    %26 = vector.shape_cast %25 : vector<1x1x32xf32> to vector<1x32xf32>
    %27 = vector.broadcast %26 : vector<1x32xf32> to vector<16x32xf32>
    %28 = arith.addf %24, %27 : vector<16x32xf32>
    %cst_27 = arith.constant 0.000000e+00 : f32
    %29 = vector.broadcast %cst_27 : f32 to vector<16x32xf32>
    %30 = arith.maximumf %28, %29 : vector<16x32xf32>
    %31 = arith.addf %30, %21 : vector<16x32xf32>
    %c0_28 = arith.constant 0 : index
    %c0_29 = arith.constant 0 : index
    %32 = vector.load %arg2[%c0_28, %c0_29] : memref<16x1024xf32, #tpu.memory_space<vmem>>, vector<16x1024xf32>
    %c0_30 = arith.constant 0 : index
    %c0_31 = arith.constant 0 : index
    %33 = vector.load %arg11[%c0_30, %c0_31] : memref<1024x32xf32, #tpu.memory_space<vmem>>, vector<1024x32xf32>
    %cst_32 = arith.constant dense<0.000000e+00> : vector<16x32xf32>
    %34 = tpu.matmul %32, %33, %cst_32 {dimension_numbers = #tpu.dot_dimension_numbers<[1], [0], [0], [1], [0, 0, 1, 1], [], []>} : vector<16x1024xf32>, vector<1024x32xf32>, vector<16x32xf32> -> vector<16x32xf32>
    %c0_33 = arith.constant 0 : index
    %c0_34 = arith.constant 0 : index
    %35 = vector.load %arg12[%c0_33, %c0_34] : memref<1x32xf32, #tpu.memory_space<vmem>>, vector<1x32xf32>
    %36 = vector.broadcast %35 : vector<1x32xf32> to vector<16x32xf32>
    %37 = arith.addf %34, %36 : vector<16x32xf32>
    %c0_35 = arith.constant 0 : index
    %c0_36 = arith.constant 0 : index
    %c0_37 = arith.constant 0 : index
    %38 = vector.load %arg13[%c0_35, %c0_36, %c0_37] : memref<1x32x32xf32, #tpu.memory_space<vmem>>, vector<1x32x32xf32>
    %39 = vector.shape_cast %38 : vector<1x32x32xf32> to vector<32x32xf32>
    %cst_38 = arith.constant dense<0.000000e+00> : vector<16x32xf32>
    %40 = tpu.matmul %37, %39, %cst_38 {dimension_numbers = #tpu.dot_dimension_numbers<[1], [0], [0], [1], [0, 0, 1, 1], [], []>} : vector<16x32xf32>, vector<32x32xf32>, vector<16x32xf32> -> vector<16x32xf32>
    %c0_39 = arith.constant 0 : index
    %c0_40 = arith.constant 0 : index
    %c0_41 = arith.constant 0 : index
    %41 = vector.load %arg14[%c0_39, %c0_40, %c0_41] : memref<1x1x32xf32, #tpu.memory_space<vmem>>, vector<1x1x32xf32>
    %42 = vector.shape_cast %41 : vector<1x1x32xf32> to vector<1x32xf32>
    %43 = vector.broadcast %42 : vector<1x32xf32> to vector<16x32xf32>
    %44 = arith.addf %40, %43 : vector<16x32xf32>
    %cst_42 = arith.constant 0.000000e+00 : f32
    %45 = vector.broadcast %cst_42 : f32 to vector<16x32xf32>
    %46 = arith.maximumf %44, %45 : vector<16x32xf32>
    %47 = arith.addf %46, %37 : vector<16x32xf32>
    %c0_43 = arith.constant 0 : index
    %c0_44 = arith.constant 0 : index
    %48 = vector.load %arg15[%c0_43, %c0_44] : memref<32x32xf32, #tpu.memory_space<vmem>>, vector<32x32xf32>
    %cst_45 = arith.constant dense<0.000000e+00> : vector<16x32xf32>
    %49 = tpu.matmul %15, %48, %cst_45 {dimension_numbers = #tpu.dot_dimension_numbers<[1], [0], [0], [1], [0, 0, 1, 1], [], []>} : vector<16x32xf32>, vector<32x32xf32>, vector<16x32xf32> -> vector<16x32xf32>
    %c0_46 = arith.constant 0 : index
    %c0_47 = arith.constant 0 : index
    %50 = vector.load %arg16[%c0_46, %c0_47] : memref<32x32xf32, #tpu.memory_space<vmem>>, vector<32x32xf32>
    %cst_48 = arith.constant dense<0.000000e+00> : vector<16x32xf32>
    %51 = tpu.matmul %31, %50, %cst_48 {dimension_numbers = #tpu.dot_dimension_numbers<[1], [0], [0], [1], [0, 0, 1, 1], [], []>} : vector<16x32xf32>, vector<32x32xf32>, vector<16x32xf32> -> vector<16x32xf32>
    %52 = arith.addf %49, %51 : vector<16x32xf32>
    %c0_49 = arith.constant 0 : index
    %c0_50 = arith.constant 0 : index
    %53 = vector.load %arg17[%c0_49, %c0_50] : memref<32x32xf32, #tpu.memory_space<vmem>>, vector<32x32xf32>
    %cst_51 = arith.constant dense<0.000000e+00> : vector<16x32xf32>
    %54 = tpu.matmul %47, %53, %cst_51 {dimension_numbers = #tpu.dot_dimension_numbers<[1], [0], [0], [1], [0, 0, 1, 1], [], []>} : vector<16x32xf32>, vector<32x32xf32>, vector<16x32xf32> -> vector<16x32xf32>
    %55 = arith.addf %52, %54 : vector<16x32xf32>
    %c0_52 = arith.constant 0 : index
    %c0_53 = arith.constant 0 : index
    %56 = vector.load %arg18[%c0_52, %c0_53] : memref<1x32xf32, #tpu.memory_space<vmem>>, vector<1x32xf32>
    %57 = vector.broadcast %56 : vector<1x32xf32> to vector<16x32xf32>
    %58 = arith.addf %55, %57 : vector<16x32xf32>
    %c0_54 = arith.constant 0 : index
    %c0_55 = arith.constant 0 : index
    %c0_56 = arith.constant 0 : index
    %59 = vector.load %arg19[%c0_54, %c0_55, %c0_56] : memref<1x32x32xf32, #tpu.memory_space<vmem>>, vector<1x32x32xf32>
    %60 = vector.shape_cast %59 : vector<1x32x32xf32> to vector<32x32xf32>
    %cst_57 = arith.constant dense<0.000000e+00> : vector<16x32xf32>
    %61 = tpu.matmul %58, %60, %cst_57 {dimension_numbers = #tpu.dot_dimension_numbers<[1], [0], [0], [1], [0, 0, 1, 1], [], []>} : vector<16x32xf32>, vector<32x32xf32>, vector<16x32xf32> -> vector<16x32xf32>
    %c0_58 = arith.constant 0 : index
    %c0_59 = arith.constant 0 : index
    %c0_60 = arith.constant 0 : index
    %62 = vector.load %arg20[%c0_58, %c0_59, %c0_60] : memref<1x1x32xf32, #tpu.memory_space<vmem>>, vector<1x1x32xf32>
    %63 = vector.shape_cast %62 : vector<1x1x32xf32> to vector<1x32xf32>
    %64 = vector.broadcast %63 : vector<1x32xf32> to vector<16x32xf32>
    %65 = arith.addf %61, %64 : vector<16x32xf32>
    %cst_61 = arith.constant 0.000000e+00 : f32
    %66 = vector.broadcast %cst_61 : f32 to vector<16x32xf32>
    %67 = arith.maximumf %65, %66 : vector<16x32xf32>
    %68 = arith.addf %67, %58 : vector<16x32xf32>
    %c0_62 = arith.constant 0 : index
    %c0_63 = arith.constant 0 : index
    %c0_64 = arith.constant 0 : index
    %69 = vector.load %arg21[%c0_62, %c0_63, %c0_64] : memref<1x16x16xf32, #tpu.memory_space<vmem>>, vector<1x16x16xf32>
    %70 = vector.shape_cast %69 : vector<1x16x16xf32> to vector<16x16xf32>
    %cst_65 = arith.constant dense<0.000000e+00> : vector<16x32xf32>
    %71 = tpu.matmul %70, %68, %cst_65 {dimension_numbers = #tpu.dot_dimension_numbers<[1], [0], [0], [1], [0, 0, 1, 1], [], []>} : vector<16x16xf32>, vector<16x32xf32>, vector<16x32xf32> -> vector<16x32xf32>
    %c0_66 = arith.constant 0 : index
    %c0_67 = arith.constant 0 : index
    %c0_68 = arith.constant 0 : index
    %72 = vector.load %arg22[%c0_66, %c0_67, %c0_68] : memref<1x32x32xf32, #tpu.memory_space<vmem>>, vector<1x32x32xf32>
    %73 = vector.shape_cast %72 : vector<1x32x32xf32> to vector<32x32xf32>
    %cst_69 = arith.constant dense<0.000000e+00> : vector<16x32xf32>
    %74 = tpu.matmul %71, %73, %cst_69 {dimension_numbers = #tpu.dot_dimension_numbers<[1], [0], [0], [1], [0, 0, 1, 1], [], []>} : vector<16x32xf32>, vector<32x32xf32>, vector<16x32xf32> -> vector<16x32xf32>
    %c0_70 = arith.constant 0 : index
    %c0_71 = arith.constant 0 : index
    %c0_72 = arith.constant 0 : index
    %75 = vector.load %arg23[%c0_70, %c0_71, %c0_72] : memref<1x1x32xf32, #tpu.memory_space<vmem>>, vector<1x1x32xf32>
    %76 = vector.shape_cast %75 : vector<1x1x32xf32> to vector<1x32xf32>
    %77 = vector.broadcast %76 : vector<1x32xf32> to vector<16x32xf32>
    %78 = arith.addf %74, %77 : vector<16x32xf32>
    %cst_73 = arith.constant 0.000000e+00 : f32
    %79 = vector.broadcast %cst_73 : f32 to vector<16x32xf32>
    %80 = arith.maximumf %78, %79 : vector<16x32xf32>
    %c0_74 = arith.constant 0 : index
    %c0_75 = arith.constant 0 : index
    %c0_76 = arith.constant 0 : index
    %81 = vector.load %arg24[%c0_74, %c0_75, %c0_76] : memref<1x32x32xf32, #tpu.memory_space<vmem>>, vector<1x32x32xf32>
    %82 = vector.shape_cast %81 : vector<1x32x32xf32> to vector<32x32xf32>
    %cst_77 = arith.constant dense<0.000000e+00> : vector<16x32xf32>
    %83 = tpu.matmul %80, %82, %cst_77 {dimension_numbers = #tpu.dot_dimension_numbers<[1], [0], [0], [1], [0, 0, 1, 1], [], []>} : vector<16x32xf32>, vector<32x32xf32>, vector<16x32xf32> -> vector<16x32xf32>
    %c0_78 = arith.constant 0 : index
    %c0_79 = arith.constant 0 : index
    %c0_80 = arith.constant 0 : index
    %84 = vector.load %arg25[%c0_78, %c0_79, %c0_80] : memref<1x1x32xf32, #tpu.memory_space<vmem>>, vector<1x1x32xf32>
    %85 = vector.shape_cast %84 : vector<1x1x32xf32> to vector<1x32xf32>
    %86 = vector.broadcast %85 : vector<1x32xf32> to vector<16x32xf32>
    %87 = arith.addf %83, %86 : vector<16x32xf32>
    %88 = arith.addf %87, %68 : vector<16x32xf32>
    %c0_81 = arith.constant 0 : index
    %c0_82 = arith.constant 0 : index
    %89 = vector.load %arg26[%c0_81, %c0_82] : memref<2x16xf32, #tpu.memory_space<vmem>>, vector<2x16xf32>
    %cst_83 = arith.constant dense<0.000000e+00> : vector<2x32xf32>
    %90 = tpu.matmul %89, %88, %cst_83 {dimension_numbers = #tpu.dot_dimension_numbers<[1], [0], [0], [1], [0, 0, 1, 1], [], []>} : vector<2x16xf32>, vector<16x32xf32>, vector<2x32xf32> -> vector<2x32xf32>
    %c0_84 = arith.constant 0 : index
    %c0_85 = arith.constant 0 : index
    %91 = vector.load %arg27[%c0_84, %c0_85] : memref<32x1xf32, #tpu.memory_space<vmem>>, vector<32x1xf32>
    %cst_86 = arith.constant dense<0.000000e+00> : vector<2x1xf32>
    %92 = tpu.matmul %90, %91, %cst_86 {dimension_numbers = #tpu.dot_dimension_numbers<[1], [0], [0], [1], [0, 0, 1, 1], [], []>} : vector<2x32xf32>, vector<32x1xf32>, vector<2x1xf32> -> vector<2x1xf32>
    %c0_87 = arith.constant 0 : index
    %c0_88 = arith.constant 0 : index
    %93 = vector.load %arg28[%c0_87, %c0_88] : memref<1x1xf32, #tpu.memory_space<vmem>>, vector<1x1xf32>
    %94 = vector.broadcast %93 : vector<1x1xf32> to vector<2x1xf32>
    %95 = arith.addf %92, %94 : vector<2x1xf32>
    %c0_89 = arith.constant 0 : index
    %c0_90 = arith.constant 0 : index
    %96 = vector.load %arg29[%c0_89, %c0_90] : memref<2x1xf32, #tpu.memory_space<vmem>>, vector<2x1xf32>
    tpu.vector_store %arg29[%c0_89, %c0_90], %95 {strides = array<i32>} : memref<2x1xf32, #tpu.memory_space<vmem>>, vector<2x1xf32>,
    return
  }
}

</mosaic_0001>

<llo_original>
// kernel: tpu_custom_call.1
$region0: #{tpu_custom_call.1}
  #allocation0 [shape = 'u32[]', space=smem, size = 0x4, offset = 0x4, fixed_abs, tag = 'smem constant byte address 0x4 - core index']
  #allocation1 [shape = 'u32[144,128]{1,0:T(1,128)}', space=vmem, size = 0x12000, scoped, tag = 'internal scratch']
  #allocation2 [shape = 'f32[1,1]{1,0:T(1,128)S(1)}', space=vmem, size = 0x200, scoped, tag = 'scoped memory for tpu_custom_call.1']
  %s0 = inlined_call_operand.smem [shape: u32[30], index: -1, kind: input, shape index: {}]
  %s1 = sld [smem:[%s0]]
  %s2 = scalar_lea.smem %s0, 1
  %s3 = sld [smem:[%s2]]
  %s4 = scalar_lea.smem %s0, 2
  %s5 = sld [smem:[%s4]]
  %s6 = scalar_lea.smem %s0, 3
  %s7 = sld [smem:[%s6]]
  %s8 = scalar_lea.smem %s0, 4
  %s9 = sld [smem:[%s8]]
  %s10 = scalar_lea.smem %s0, 5
  %s11 = sld [smem:[%s10]]
  %s12 = scalar_lea.smem %s0, 6
  %s13 = sld [smem:[%s12]]
  %s14 = scalar_lea.smem %s0, 7
  %s15 = sld [smem:[%s14]]
  %s16 = scalar_lea.smem %s0, 8
  %s17 = sld [smem:[%s16]]
  %s18 = scalar_lea.smem %s0, 9
  %s19 = sld [smem:[%s18]]
  %s20 = scalar_lea.smem %s0, 10
  %s21 = sld [smem:[%s20]]
  %s22 = scalar_lea.smem %s0, 11
  %s23 = sld [smem:[%s22]]
  %s24 = scalar_lea.smem %s0, 12
  %s25 = sld [smem:[%s24]]
  %s26 = scalar_lea.smem %s0, 13
  %s27 = sld [smem:[%s26]]
  %s28 = scalar_lea.smem %s0, 14
  %s29 = sld [smem:[%s28]]
  %s30 = scalar_lea.smem %s0, 15
  %s31 = sld [smem:[%s30]]
  %s32 = scalar_lea.smem %s0, 16
  %s33 = sld [smem:[%s32]]
  %s34 = scalar_lea.smem %s0, 17
  %s35 = sld [smem:[%s34]]
  %s36 = scalar_lea.smem %s0, 18
  %s37 = sld [smem:[%s36]]
  %s38 = scalar_lea.smem %s0, 19
  %s39 = sld [smem:[%s38]]
  %s40 = scalar_lea.smem %s0, 20
  %s41 = sld [smem:[%s40]]
  %s42 = scalar_lea.smem %s0, 21
  %s43 = sld [smem:[%s42]]
  %s44 = scalar_lea.smem %s0, 22
  %s45 = sld [smem:[%s44]]
  %s46 = scalar_lea.smem %s0, 23
  %s47 = sld [smem:[%s46]]
  %s48 = scalar_lea.smem %s0, 24
  %s49 = sld [smem:[%s48]]
  %s50 = scalar_lea.smem %s0, 25
  %s51 = sld [smem:[%s50]]
  %s52 = scalar_lea.smem %s0, 26
  %s53 = sld [smem:[%s52]]
  %s54 = scalar_lea.smem %s0, 27
  %s55 = sld [smem:[%s54]]
  %s56 = scalar_lea.smem %s0, 28
  %s57 = sld [smem:[%s56]]
  %s58 = scalar_lea.smem %s0, 29
  %s59 = sld [smem:[%s58]]
  %s60 = sld [smem:[#allocation0]]
  $region126: #{tpu_custom_call.1} parent=0
    _
  %s62 = ssub.s32 1, %s60
  %s63 = scalar_select 0, %s62, %s60
  %v64 = vstv %s57
  %65 = vst [vmem:[#allocation2] sm:$0x1] %v64
  // Predicated region
  $region2: #{tpu_custom_call.1} parent=0 // pred_check
    _
  $region3: #{tpu_custom_call.1} parent=0 // pred_check_branch
    %67 = sbr.rel (0) target = $region5
  $region4: #{tpu_custom_call.1} parent=0 // pred_region
    _
  $region5: #{tpu_custom_call.1} parent=0 // pred_fallthru
    _
  // Predicated region
  $region6: #{tpu_custom_call.1} parent=0 // pred_check
    _
  $region7: #{tpu_custom_call.1} parent=0 // pred_check_branch
    %69 = sbr.rel (0) target = $region9
  $region8: #{tpu_custom_call.1} parent=0 // pred_region
    _
  $region9: #{tpu_custom_call.1} parent=0 // pred_fallthru
    _
  // Predicated region
  $region10: #{tpu_custom_call.1} parent=0 // pred_check
    _
  $region11: #{tpu_custom_call.1} parent=0 // pred_check_branch
    %71 = sbr.rel (0) target = $region13
  $region12: #{tpu_custom_call.1} parent=0 // pred_region
    _
  $region13: #{tpu_custom_call.1} parent=0 // pred_fallthru
    _
  // Predicated region
  $region14: #{tpu_custom_call.1} parent=0 // pred_check
    _
  $region15: #{tpu_custom_call.1} parent=0 // pred_check_branch
    %73 = sbr.rel (0) target = $region17
  $region16: #{tpu_custom_call.1} parent=0 // pred_region
    _
  $region17: #{tpu_custom_call.1} parent=0 // pred_fallthru
    _
  // Predicated region
  $region18: #{tpu_custom_call.1} parent=0 // pred_check
    _
  $region19: #{tpu_custom_call.1} parent=0 // pred_check_branch
    %75 = sbr.rel (0) target = $region21
  $region20: #{tpu_custom_call.1} parent=0 // pred_region
    _
  $region21: #{tpu_custom_call.1} parent=0 // pred_fallthru
    _
  // Predicated region
  $region22: #{tpu_custom_call.1} parent=0 // pred_check
    _
  $region23: #{tpu_custom_call.1} parent=0 // pred_check_branch
    %77 = sbr.rel (0) target = $region25
  $region24: #{tpu_custom_call.1} parent=0 // pred_region
    _
  $region25: #{tpu_custom_call.1} parent=0 // pred_fallthru
    _
  // Predicated region
  $region26: #{tpu_custom_call.1} parent=0 // pred_check
    _
  $region27: #{tpu_custom_call.1} parent=0 // pred_check_branch
    %79 = sbr.rel (0) target = $region29
  $region28: #{tpu_custom_call.1} parent=0 // pred_region
    _
  $region29: #{tpu_custom_call.1} parent=0 // pred_fallthru
    _
  // Predicated region
  $region30: #{tpu_custom_call.1} parent=0 // pred_check
    _
  $region31: #{tpu_custom_call.1} parent=0 // pred_check_branch
    %81 = sbr.rel (0) target = $region33
  $region32: #{tpu_custom_call.1} parent=0 // pred_region
    _
  $region33: #{tpu_custom_call.1} parent=0 // pred_fallthru
    _
  // Predicated region
  $region34: #{tpu_custom_call.1} parent=0 // pred_check
    _
  $region35: #{tpu_custom_call.1} parent=0 // pred_check_branch
    %83 = sbr.rel (0) target = $region37
  $region36: #{tpu_custom_call.1} parent=0 // pred_region
    _
  $region37: #{tpu_custom_call.1} parent=0 // pred_fallthru
    _
  // Predicated region
  $region38: #{tpu_custom_call.1} parent=0 // pred_check
    _
  $region39: #{tpu_custom_call.1} parent=0 // pred_check_branch
    %85 = sbr.rel (0) target = $region41
  $region40: #{tpu_custom_call.1} parent=0 // pred_region
    _
  $region41: #{tpu_custom_call.1} parent=0 // pred_fallthru
    _
  // Predicated region
  $region42: #{tpu_custom_call.1} parent=0 // pred_check
    _
  $region43: #{tpu_custom_call.1} parent=0 // pred_check_branch
    %87 = sbr.rel (0) target = $region45
  $region44: #{tpu_custom_call.1} parent=0 // pred_region
    _
  $region45: #{tpu_custom_call.1} parent=0 // pred_fallthru
    _
  // Predicated region
  $region46: #{tpu_custom_call.1} parent=0 // pred_check
    _
  $region47: #{tpu_custom_call.1} parent=0 // pred_check_branch
    %89 = sbr.rel (0) target = $region49
  $region48: #{tpu_custom_call.1} parent=0 // pred_region
    _
  $region49: #{tpu_custom_call.1} parent=0 // pred_fallthru
    _
  // Predicated region
  $region50: #{tpu_custom_call.1} parent=0 // pred_check
    _
  $region51: #{tpu_custom_call.1} parent=0 // pred_check_branch
    %91 = sbr.rel (0) target = $region53
  $region52: #{tpu_custom_call.1} parent=0 // pred_region
    _
  $region53: #{tpu_custom_call.1} parent=0 // pred_fallthru
    _
  // Predicated region
  $region54: #{tpu_custom_call.1} parent=0 // pred_check
    _
  $region55: #{tpu_custom_call.1} parent=0 // pred_check_branch
    %93 = sbr.rel (0) target = $region57
  $region56: #{tpu_custom_call.1} parent=0 // pred_region
    _
  $region57: #{tpu_custom_call.1} parent=0 // pred_fallthru
    _
  // Predicated region
  $region58: #{tpu_custom_call.1} parent=0 // pred_check
    _
  $region59: #{tpu_custom_call.1} parent=0 // pred_check_branch
    %95 = sbr.rel (0) target = $region61
  $region60: #{tpu_custom_call.1} parent=0 // pred_region
    _
  $region61: #{tpu_custom_call.1} parent=0 // pred_fallthru
    _
  // Predicated region
  $region62: #{tpu_custom_call.1} parent=0 // pred_check
    _
  $region63: #{tpu_custom_call.1} parent=0 // pred_check_branch
    %97 = sbr.rel (0) target = $region65
  $region64: #{tpu_custom_call.1} parent=0 // pred_region
    _
  $region65: #{tpu_custom_call.1} parent=0 // pred_fallthru
    _
  // Predicated region
  $region66: #{tpu_custom_call.1} parent=0 // pred_check
    _
  $region67: #{tpu_custom_call.1} parent=0 // pred_check_branch
    %99 = sbr.rel (0) target = $region69
  $region68: #{tpu_custom_call.1} parent=0 // pred_region
    _
  $region69: #{tpu_custom_call.1} parent=0 // pred_fallthru
    _
  // Predicated region
  $region70: #{tpu_custom_call.1} parent=0 // pred_check
    _
  $region71: #{tpu_custom_call.1} parent=0 // pred_check_branch
    %101 = sbr.rel (0) target = $region73
  $region72: #{tpu_custom_call.1} parent=0 // pred_region
    _
  $region73: #{tpu_custom_call.1} parent=0 // pred_fallthru
    _
  // Predicated region
  $region74: #{tpu_custom_call.1} parent=0 // pred_check
    _
  $region75: #{tpu_custom_call.1} parent=0 // pred_check_branch
    %103 = sbr.rel (0) target = $region77
  $region76: #{tpu_custom_call.1} parent=0 // pred_region
    _
  $region77: #{tpu_custom_call.1} parent=0 // pred_fallthru
    _
  // Predicated region
  $region78: #{tpu_custom_call.1} parent=0 // pred_check
    _
  $region79: #{tpu_custom_call.1} parent=0 // pred_check_branch
    %105 = sbr.rel (0) target = $region81
  $region80: #{tpu_custom_call.1} parent=0 // pred_region
    _
  $region81: #{tpu_custom_call.1} parent=0 // pred_fallthru
    _
  // Predicated region
  $region82: #{tpu_custom_call.1} parent=0 // pred_check
    _
  $region83: #{tpu_custom_call.1} parent=0 // pred_check_branch
    %107 = sbr.rel (0) target = $region85
  $region84: #{tpu_custom_call.1} parent=0 // pred_region
    _
  $region85: #{tpu_custom_call.1} parent=0 // pred_fallthru
    _
  // Predicated region
  $region86: #{tpu_custom_call.1} parent=0 // pred_check
    _
  $region87: #{tpu_custom_call.1} parent=0 // pred_check_branch
    %109 = sbr.rel (0) target = $region89
  $region88: #{tpu_custom_call.1} parent=0 // pred_region
    _
  $region89: #{tpu_custom_call.1} parent=0 // pred_fallthru
    _
  // Predicated region
  $region90: #{tpu_custom_call.1} parent=0 // pred_check
    _
  $region91: #{tpu_custom_call.1} parent=0 // pred_check_branch
    %111 = sbr.rel (0) target = $region93
  $region92: #{tpu_custom_call.1} parent=0 // pred_region
    _
  $region93: #{tpu_custom_call.1} parent=0 // pred_fallthru
    _
  // Predicated region
  $region94: #{tpu_custom_call.1} parent=0 // pred_check
    _
  $region95: #{tpu_custom_call.1} parent=0 // pred_check_branch
    %113 = sbr.rel (0) target = $region97
  $region96: #{tpu_custom_call.1} parent=0 // pred_region
    _
  $region97: #{tpu_custom_call.1} parent=0 // pred_fallthru
    _
  // Predicated region
  $region98: #{tpu_custom_call.1} parent=0 // pred_check
    _
  $region99: #{tpu_custom_call.1} parent=0 // pred_check_branch
    %115 = sbr.rel (0) target = $region101
  $region100: #{tpu_custom_call.1} parent=0 // pred_region
    _
  $region101: #{tpu_custom_call.1} parent=0 // pred_fallthru
    _
  // Predicated region
  $region102: #{tpu_custom_call.1} parent=0 // pred_check
    _
  $region103: #{tpu_custom_call.1} parent=0 // pred_check_branch
    %117 = sbr.rel (0) target = $region105
  $region104: #{tpu_custom_call.1} parent=0 // pred_region
    _
  $region105: #{tpu_custom_call.1} parent=0 // pred_fallthru
    _
  // Predicated region
  $region106: #{tpu_custom_call.1} parent=0 // pred_check
    _
  $region107: #{tpu_custom_call.1} parent=0 // pred_check_branch
    %119 = sbr.rel (0) target = $region109
  $region108: #{tpu_custom_call.1} parent=0 // pred_region
    _
  $region109: #{tpu_custom_call.1} parent=0 // pred_fallthru
    _
  // Predicated region
  $region110: #{tpu_custom_call.1} parent=0 // pred_check
    _
  $region111: #{tpu_custom_call.1} parent=0 // pred_check_branch
    %121 = sbr.rel (0) target = $region113
  $region112: #{tpu_custom_call.1} parent=0 // pred_region
    _
  $region113: #{tpu_custom_call.1} parent=0 // pred_fallthru
    _
  // Predicated region
  $region114: #{tpu_custom_call.1} parent=0 // pred_check
    _
  $region115: #{tpu_custom_call.1} parent=0 // pred_check_branch
    %123 = sbr.rel (0) target = $region117
  $region116: #{tpu_custom_call.1} parent=0 // pred_region
    _
  $region117: #{tpu_custom_call.1} parent=0 // pred_fallthru
    _
  %v124 = vld [vmem:[%s1] sm:$0xff]
  %v125 = vld [vmem:[%s1 + $0x8] sm:$0xff]
  %v126 = vld [vmem:[%s7] sm:$0xff]
  %v127 = vld [vmem:[%s7 + $0x8] sm:$0xff]
  %v128 = vld [vmem:[%s7 + $0x10] sm:$0xff]
  %v129 = vld [vmem:[%s7 + $0x18] sm:$0x3f]
  %v130 = vld [vmem:[%s9] sm:$0x1]
  %v132 = vlaneseq
  %v133 = vshrl.u32 %v132, 7
  %v134 = vsub.s32 0, %v133
  %v135 = vrot.slane %v130, %v134
  %vm137 = vcmask 244736
  %v139 = vsel %vm137, %v124, 0
  %v142 = vsel %vm137, %v125, 0
  %vm144 = vcmask 1045504
  %v146 = vsel %vm144, %v129, 0
  %148 = vmatprep.subr.mxu0 0.0
  %149 = vmatpush1.msra.mxu0 0.0
  %150 = vmatprep.subr.mxu0 0.0
  %151 = vmatpush1.msra.mxu0 0.0
  %152 = vmatprep.subr.mxu0 0.0
  %153 = vmatpush1.msra.mxu0 0.0
  %154 = vmatprep.subr.mxu0 0.0
  %155 = vmatpush1.msra.mxu0 0.0
  %156 = vmatprep.subr.mxu0 0.0
  %157 = vmatpush1.msra.mxu0 0.0
  %158 = vmatprep.subr.mxu0 0.0
  %159 = vmatpush1.msra.mxu0 0.0
  %160 = vmatprep.subr.mxu0 0.0
  %161 = vmatpush1.msra.mxu0 0.0
  %162 = vmatprep.subr.mxu0 0.0
  %163 = vmatpush1.msra.mxu0 0.0
  %164 = vmatprep.subr.mxu0 0.0
  %165 = vmatpush1.msra.mxu0 0.0
  %166 = vmatprep.subr.mxu0 0.0
  %167 = vmatpush1.msra.mxu0 0.0
  %168 = vmatprep.subr.mxu0 0.0
  %169 = vmatpush1.msra.mxu0 0.0
  %170 = vmatprep.subr.mxu0 0.0
  %171 = vmatpush1.msra.mxu0 0.0
  %172 = vmatprep.subr.mxu0 0.0
  %173 = vmatpush1.msra.mxu0 %v146
  %174 = vmatprep.subr.mxu0 0.0
  %175 = vmatpush1.msra.mxu0 %v128
  %176 = vmatprep.subr.mxu0 0.0
  %177 = vmatpush1.msra.mxu0 %v127
  %178 = vmatprep.subr.mxu0 0.0
  %179 = vmatpush1.msra.mxu0 %v126
  %180 = vmatprep.subr.mxu0 0.0
  %181 = vmatpush2.msra.mxu0 0.0
  %182 = vmatprep.subr.mxu0 0.0
  %183 = vmatpush2.msra.mxu0 0.0
  %184 = vmatprep.subr.mxu0 0.0
  %185 = vmatpush2.msra.mxu0 0.0
  %186 = vmatprep.subr.mxu0 0.0
  %187 = vmatpush2.msra.mxu0 0.0
  %188 = vmatprep.subr.mxu0 0.0
  %189 = vmatpush2.msra.mxu0 0.0
  %190 = vmatprep.subr.mxu0 0.0
  %191 = vmatpush2.msra.mxu0 0.0
  %192 = vmatprep.subr.mxu0 0.0
  %193 = vmatpush2.msra.mxu0 0.0
  %194 = vmatprep.subr.mxu0 0.0
  %195 = vmatpush2.msra.mxu0 0.0
  %196 = vmatprep.subr.mxu0 0.0
  %197 = vmatpush2.msra.mxu0 0.0
  %198 = vmatprep.subr.mxu0 0.0
  %199 = vmatpush2.msra.mxu0 0.0
  %200 = vmatprep.subr.mxu0 0.0
  %201 = vmatpush2.msra.mxu0 0.0
  %202 = vmatprep.subr.mxu0 0.0
  %203 = vmatpush2.msra.mxu0 0.0
  %204 = vmatprep.subr.mxu0 0.0
  %205 = vmatpush2.msra.mxu0 0.0
  %206 = vmatprep.subr.mxu0 0.0
  %207 = vmatpush2.msra.mxu0 0.0
  %208 = vmatprep.subr.mxu0 0.0
  %209 = vmatpush2.msra.mxu0 0.0
  %210 = vmatprep.subr.mxu0 0.0
  %211 = vmatpush2.msra.mxu0 0.0
  %212 = vmatprep.mubr.f32.mxu0 0.0
  %213 = vmatmul.mubr.f32.gmra.mxu0 %v139
  %v214 = vpop.f32.mrf.mxu0
  %v215 = vadd.f32 %v135, %v214
  %v216 = vpop.f32.mrf.mxu0
  %217 = vmatprep.mubr.f32.mxu0 0.0
  %218 = vmatmul.mubr.f32.gmra.mxu0 %v142
  %v219 = vpop.f32.mrf.mxu0
  %v220 = vadd.f32 %v135, %v219
  %v221 = vpop.f32.mrf.mxu0
  %222 = vdwg.mxu0
  %v223 = vld [vmem:[%s11] sm:$0xff]
  %v224 = vld [vmem:[%s11 + $0x8] sm:$0xff]
  %v225 = vld [vmem:[%s11 + $0x10] sm:$0xff]
  %v226 = vld [vmem:[%s11 + $0x18] sm:$0xff]
  %v227 = vld [vmem:[%s13] sm:$0x1]
  %v229 = vlaneseq
  %v230 = vshrl.u32 %v229, 7
  %v231 = vsub.s32 0, %v230
  %v232 = vrot.slane %v227, %v231
  %vm234 = vcmask 261120
  %v236 = vsel %vm234, %v215, 0
  %v239 = vsel %vm234, %v220, 0
  %241 = vmatprep.subr.mxu0 0.0
  %242 = vmatpush1.msra.mxu0 0.0
  %243 = vmatprep.subr.mxu0 0.0
  %244 = vmatpush1.msra.mxu0 0.0
  %245 = vmatprep.subr.mxu0 0.0
  %246 = vmatpush1.msra.mxu0 0.0
  %247 = vmatprep.subr.mxu0 0.0
  %248 = vmatpush1.msra.mxu0 0.0
  %249 = vmatprep.subr.mxu0 0.0
  %250 = vmatpush1.msra.mxu0 0.0
  %251 = vmatprep.subr.mxu0 0.0
  %252 = vmatpush1.msra.mxu0 0.0
  %253 = vmatprep.subr.mxu0 0.0
  %254 = vmatpush1.msra.mxu0 0.0
  %255 = vmatprep.subr.mxu0 0.0
  %256 = vmatpush1.msra.mxu0 0.0
  %257 = vmatprep.subr.mxu0 0.0
  %258 = vmatpush1.msra.mxu0 0.0
  %259 = vmatprep.subr.mxu0 0.0
  %260 = vmatpush1.msra.mxu0 0.0
  %261 = vmatprep.subr.mxu0 0.0
  %262 = vmatpush1.msra.mxu0 0.0
  %263 = vmatprep.subr.mxu0 0.0
  %264 = vmatpush1.msra.mxu0 0.0
  %265 = vmatprep.subr.mxu0 0.0
  %266 = vmatpush1.msra.mxu0 %v226
  %267 = vmatprep.subr.mxu0 0.0
  %268 = vmatpush1.msra.mxu0 %v225
  %269 = vmatprep.subr.mxu0 0.0
  %270 = vmatpush1.msra.mxu0 %v224
  %271 = vmatprep.subr.mxu0 0.0
  %272 = vmatpush1.msra.mxu0 %v223
  %273 = vmatprep.subr.mxu0 0.0
  %274 = vmatpush2.msra.mxu0 0.0
  %275 = vmatprep.subr.mxu0 0.0
  %276 = vmatpush2.msra.mxu0 0.0
  %277 = vmatprep.subr.mxu0 0.0
  %278 = vmatpush2.msra.mxu0 0.0
  %279 = vmatprep.subr.mxu0 0.0
  %280 = vmatpush2.msra.mxu0 0.0
  %281 = vmatprep.subr.mxu0 0.0
  %282 = vmatpush2.msra.mxu0 0.0
  %283 = vmatprep.subr.mxu0 0.0
  %284 = vmatpush2.msra.mxu0 0.0
  %285 = vmatprep.subr.mxu0 0.0
  %286 = vmatpush2.msra.mxu0 0.0
  %287 = vmatprep.subr.mxu0 0.0
  %288 = vmatpush2.msra.mxu0 0.0
  %289 = vmatprep.subr.mxu0 0.0
  %290 = vmatpush2.msra.mxu0 0.0
  %291 = vmatprep.subr.mxu0 0.0
  %292 = vmatpush2.msra.mxu0 0.0
  %293 = vmatprep.subr.mxu0 0.0
  %294 = vmatpush2.msra.mxu0 0.0
  %295 = vmatprep.subr.mxu0 0.0
  %296 = vmatpush2.msra.mxu0 0.0
  %297 = vmatprep.subr.mxu0 0.0
  %298 = vmatpush2.msra.mxu0 0.0
  %299 = vmatprep.subr.mxu0 0.0
  %300 = vmatpush2.msra.mxu0 0.0
  %301 = vmatprep.subr.mxu0 0.0
  %302 = vmatpush2.msra.mxu0 0.0
  %303 = vmatprep.subr.mxu0 0.0
  %304 = vmatpush2.msra.mxu0 0.0
  %305 = vmatprep.mubr.f32.mxu0 0.0
  %306 = vmatmul.mubr.f32.gmra.mxu0 %v236
  %v307 = vpop.f32.mrf.mxu0
  %v308 = vadd.f32 %v232, %v307
  %v309 = vpop.f32.mrf.mxu0
  %310 = vmatprep.mubr.f32.mxu0 0.0
  %311 = vmatmul.mubr.f32.gmra.mxu0 %v239
  %v312 = vpop.f32.mrf.mxu0
  %v313 = vadd.f32 %v232, %v312
  %v314 = vpop.f32.mrf.mxu0
  %315 = vdwg.mxu0
  %v316 = vmax.f32 %v308, 0.0
  %v317 = vmax.f32 %v313, 0.0
  %v318 = vadd.f32 %v316, %v215
  %v319 = vadd.f32 %v317, %v220
  %v320 = vld [vmem:[%s3] sm:$0xff]
  %v321 = vld [vmem:[%s3 + $0x8] sm:$0xff]
  %v322 = vld [vmem:[%s15] sm:$0x7f]
  %v323 = vld [vmem:[%s17] sm:$0x1]
  %v325 = vlaneseq
  %v326 = vshrl.u32 %v325, 7
  %v327 = vsub.s32 0, %v326
  %v328 = vrot.slane %v323, %v327
  %vm330 = vcmask 56320
  %v332 = vsel %vm330, %v320, 0
  %v335 = vsel %vm330, %v321, 0
  %vm337 = vcmask 1046528
  %v339 = vsel %vm337, %v322, 0
  %341 = vmatprep.subr.mxu0 0.0
  %342 = vmatpush1.msra.mxu0 0.0
  %343 = vmatprep.subr.mxu0 0.0
  %344 = vmatpush1.msra.mxu0 0.0
  %345 = vmatprep.subr.mxu0 0.0
  %346 = vmatpush1.msra.mxu0 0.0
  %347 = vmatprep.subr.mxu0 0.0
  %348 = vmatpush1.msra.mxu0 0.0
  %349 = vmatprep.subr.mxu0 0.0
  %350 = vmatpush1.msra.mxu0 0.0
  %351 = vmatprep.subr.mxu0 0.0
  %352 = vmatpush1.msra.mxu0 0.0
  %353 = vmatprep.subr.mxu0 0.0
  %354 = vmatpush1.msra.mxu0 0.0
  %355 = vmatprep.subr.mxu0 0.0
  %356 = vmatpush1.msra.mxu0 0.0
  %357 = vmatprep.subr.mxu0 0.0
  %358 = vmatpush1.msra.mxu0 0.0
  %359 = vmatprep.subr.mxu0 0.0
  %360 = vmatpush1.msra.mxu0 0.0
  %361 = vmatprep.subr.mxu0 0.0
  %362 = vmatpush1.msra.mxu0 0.0
  %363 = vmatprep.subr.mxu0 0.0
  %364 = vmatpush1.msra.mxu0 0.0
  %365 = vmatprep.subr.mxu0 0.0
  %366 = vmatpush1.msra.mxu0 0.0
  %367 = vmatprep.subr.mxu0 0.0
  %368 = vmatpush1.msra.mxu0 0.0
  %369 = vmatprep.subr.mxu0 0.0
  %370 = vmatpush1.msra.mxu0 0.0
  %371 = vmatprep.subr.mxu0 0.0
  %372 = vmatpush1.msra.mxu0 %v339
  %373 = vmatprep.subr.mxu0 0.0
  %374 = vmatpush2.msra.mxu0 0.0
  %375 = vmatprep.subr.mxu0 0.0
  %376 = vmatpush2.msra.mxu0 0.0
  %377 = vmatprep.subr.mxu0 0.0
  %378 = vmatpush2.msra.mxu0 0.0
  %379 = vmatprep.subr.mxu0 0.0
  %380 = vmatpush2.msra.mxu0 0.0
  %381 = vmatprep.subr.mxu0 0.0
  %382 = vmatpush2.msra.mxu0 0.0
  %383 = vmatprep.subr.mxu0 0.0
  %384 = vmatpush2.msra.mxu0 0.0
  %385 = vmatprep.subr.mxu0 0.0
  %386 = vmatpush2.msra.mxu0 0.0
  %387 = vmatprep.subr.mxu0 0.0
  %388 = vmatpush2.msra.mxu0 0.0
  %389 = vmatprep.subr.mxu0 0.0
  %390 = vmatpush2.msra.mxu0 0.0
  %391 = vmatprep.subr.mxu0 0.0
  %392 = vmatpush2.msra.mxu0 0.0
  %393 = vmatprep.subr.mxu0 0.0
  %394 = vmatpush2.msra.mxu0 0.0
  %395 = vmatprep.subr.mxu0 0.0
  %396 = vmatpush2.msra.mxu0 0.0
  %397 = vmatprep.subr.mxu0 0.0
  %398 = vmatpush2.msra.mxu0 0.0
  %399 = vmatprep.subr.mxu0 0.0
  %400 = vmatpush2.msra.mxu0 0.0
  %401 = vmatprep.subr.mxu0 0.0
  %402 = vmatpush2.msra.mxu0 0.0
  %403 = vmatprep.subr.mxu0 0.0
  %404 = vmatpush2.msra.mxu0 0.0
  %405 = vmatprep.mubr.f32.mxu0 0.0
  %406 = vmatmul.mubr.f32.gmra.mxu0 %v332
  %v407 = vpop.f32.mrf.mxu0
  %v408 = vadd.f32 %v328, %v407
  %v409 = vpop.f32.mrf.mxu0
  %410 = vmatprep.mubr.f32.mxu0 0.0
  %411 = vmatmul.mubr.f32.gmra.mxu0 %v335
  %v412 = vpop.f32.mrf.mxu0
  %v413 = vadd.f32 %v328, %v412
  %v414 = vpop.f32.mrf.mxu0
  %415 = vdwg.mxu0
  %v416 = vld [vmem:[%s19] sm:$0xff]
  %v417 = vld [vmem:[%s19 + $0x8] sm:$0xff]
  %v418 = vld [vmem:[%s19 + $0x10] sm:$0xff]
  %v419 = vld [vmem:[%s19 + $0x18] sm:$0xff]
  %v420 = vld [vmem:[%s21] sm:$0x1]
  %v422 = vlaneseq
  %v423 = vshrl.u32 %v422, 7
  %v424 = vsub.s32 0, %v423
  %v425 = vrot.slane %v420, %v424
  %v428 = vsel %vm234, %v408, 0
  %v431 = vsel %vm234, %v413, 0
  %433 = vmatprep.subr.mxu0 0.0
  %434 = vmatpush1.msra.mxu0 0.0
  %435 = vmatprep.subr.mxu0 0.0
  %436 = vmatpush1.msra.mxu0 0.0
  %437 = vmatprep.subr.mxu0 0.0
  %438 = vmatpush1.msra.mxu0 0.0
  %439 = vmatprep.subr.mxu0 0.0
  %440 = vmatpush1.msra.mxu0 0.0
  %441 = vmatprep.subr.mxu0 0.0
  %442 = vmatpush1.msra.mxu0 0.0
  %443 = vmatprep.subr.mxu0 0.0
  %444 = vmatpush1.msra.mxu0 0.0
  %445 = vmatprep.subr.mxu0 0.0
  %446 = vmatpush1.msra.mxu0 0.0
  %447 = vmatprep.subr.mxu0 0.0
  %448 = vmatpush1.msra.mxu0 0.0
  %449 = vmatprep.subr.mxu0 0.0
  %450 = vmatpush1.msra.mxu0 0.0
  %451 = vmatprep.subr.mxu0 0.0
  %452 = vmatpush1.msra.mxu0 0.0
  %453 = vmatprep.subr.mxu0 0.0
  %454 = vmatpush1.msra.mxu0 0.0
  %455 = vmatprep.subr.mxu0 0.0
  %456 = vmatpush1.msra.mxu0 0.0
  %457 = vmatprep.subr.mxu0 0.0
  %458 = vmatpush1.msra.mxu0 %v419
  %459 = vmatprep.subr.mxu0 0.0
  %460 = vmatpush1.msra.mxu0 %v418
  %461 = vmatprep.subr.mxu0 0.0
  %462 = vmatpush1.msra.mxu0 %v417
  %463 = vmatprep.subr.mxu0 0.0
  %464 = vmatpush1.msra.mxu0 %v416
  %465 = vmatprep.subr.mxu0 0.0
  %466 = vmatpush2.msra.mxu0 0.0
  %467 = vmatprep.subr.mxu0 0.0
  %468 = vmatpush2.msra.mxu0 0.0
  %469 = vmatprep.subr.mxu0 0.0
  %470 = vmatpush2.msra.mxu0 0.0
  %471 = vmatprep.subr.mxu0 0.0
  %472 = vmatpush2.msra.mxu0 0.0
  %473 = vmatprep.subr.mxu0 0.0
  %474 = vmatpush2.msra.mxu0 0.0
  %475 = vmatprep.subr.mxu0 0.0
  %476 = vmatpush2.msra.mxu0 0.0
  %477 = vmatprep.subr.mxu0 0.0
  %478 = vmatpush2.msra.mxu0 0.0
  %479 = vmatprep.subr.mxu0 0.0
  %480 = vmatpush2.msra.mxu0 0.0
  %481 = vmatprep.subr.mxu0 0.0
  %482 = vmatpush2.msra.mxu0 0.0
  %483 = vmatprep.subr.mxu0 0.0
  %484 = vmatpush2.msra.mxu0 0.0
  %485 = vmatprep.subr.mxu0 0.0
  %486 = vmatpush2.msra.mxu0 0.0
  %487 = vmatprep.subr.mxu0 0.0
  %488 = vmatpush2.msra.mxu0 0.0
  %489 = vmatprep.subr.mxu0 0.0
  %490 = vmatpush2.msra.mxu0 0.0
  %491 = vmatprep.subr.mxu0 0.0
  %492 = vmatpush2.msra.mxu0 0.0
  %493 = vmatprep.subr.mxu0 0.0
  %494 = vmatpush2.msra.mxu0 0.0
  %495 = vmatprep.subr.mxu0 0.0
  %496 = vmatpush2.msra.mxu0 0.0
  %497 = vmatprep.mubr.f32.mxu0 0.0
  %498 = vmatmul.mubr.f32.gmra.mxu0 %v428
  %v499 = vpop.f32.mrf.mxu0
  %v500 = vadd.f32 %v425, %v499
  %v501 = vpop.f32.mrf.mxu0
  %502 = vmatprep.mubr.f32.mxu0 0.0
  %503 = vmatmul.mubr.f32.gmra.mxu0 %v431
  %v504 = vpop.f32.mrf.mxu0
  %v505 = vadd.f32 %v425, %v504
  %v506 = vpop.f32.mrf.mxu0
  %507 = vdwg.mxu0
  %v508 = vmax.f32 %v500, 0.0
  %v509 = vmax.f32 %v505, 0.0
  %v510 = vadd.f32 %v508, %v408
  %v511 = vadd.f32 %v509, %v413
  %v512 = vld [vmem:[%s5] sm:$0xff]
  %v513 = vld [vmem:[%s5 + $0x8] sm:$0xff]
  %v514 = vld [vmem:[%s5 + $0x10] sm:$0xff]
  %v515 = vld [vmem:[%s5 + $0x18] sm:$0xff]
  %v516 = vld [vmem:[%s5 + $0x20] sm:$0xff]
  %v517 = vld [vmem:[%s5 + $0x28] sm:$0xff]
  %v518 = vld [vmem:[%s5 + $0x30] sm:$0xff]
  %v519 = vld [vmem:[%s5 + $0x38] sm:$0xff]
  %v520 = vld [vmem:[%s5 + $0x40] sm:$0xff]
  %v521 = vld [vmem:[%s5 + $0x48] sm:$0xff]
  %v522 = vld [vmem:[%s5 + $0x50] sm:$0xff]
  %v523 = vld [vmem:[%s5 + $0x58] sm:$0xff]
  %v524 = vld [vmem:[%s5 + $0x60] sm:$0xff]
  %v525 = vld [vmem:[%s5 + $0x68] sm:$0xff]
  %v526 = vld [vmem:[%s5 + $0x70] sm:$0xff]
  %v527 = vld [vmem:[%s5 + $0x78] sm:$0xff]
  %v528 = vld [vmem:[%s23] sm:$0xff]
  %v529 = vld [vmem:[%s23 + $0x8] sm:$0xff]
  %v530 = vld [vmem:[%s23 + $0x10] sm:$0xff]
  %v531 = vld [vmem:[%s23 + $0x18] sm:$0xff]
  %v532 = vld [vmem:[%s23 + $0x20] sm:$0xff]
  %v533 = vld [vmem:[%s23 + $0x28] sm:$0xff]
  %v534 = vld [vmem:[%s23 + $0x30] sm:$0xff]
  %v535 = vld [vmem:[%s23 + $0x38] sm:$0xff]
  %v536 = vld [vmem:[%s23 + $0x40] sm:$0xff]
  %v537 = vld [vmem:[%s23 + $0x48] sm:$0xff]
  %v538 = vld [vmem:[%s23 + $0x50] sm:$0xff]
  %v539 = vld [vmem:[%s23 + $0x58] sm:$0xff]
  %v540 = vld [vmem:[%s23 + $0x60] sm:$0xff]
  %v541 = vld [vmem:[%s23 + $0x68] sm:$0xff]
  %v542 = vld [vmem:[%s23 + $0x70] sm:$0xff]
  %v543 = vld [vmem:[%s23 + $0x78] sm:$0xff]
  %v544 = vld [vmem:[%s23 + $0x80] sm:$0xff]
  %v545 = vld [vmem:[%s23 + $0x88] sm:$0xff]
  %v546 = vld [vmem:[%s23 + $0x90] sm:$0xff]
  %v547 = vld [vmem:[%s23 + $0x98] sm:$0xff]
  %v548 = vld [vmem:[%s23 + $0xa0] sm:$0xff]
  %v549 = vld [vmem:[%s23 + $0xa8] sm:$0xff]
  %v550 = vld [vmem:[%s23 + $0xb0] sm:$0xff]
  %v551 = vld [vmem:[%s23 + $0xb8] sm:$0xff]
  %v552 = vld [vmem:[%s23 + $0xc0] sm:$0xff]
  %v553 = vld [vmem:[%s23 + $0xc8] sm:$0xff]
  %v554 = vld [vmem:[%s23 + $0xd0] sm:$0xff]
  %v555 = vld [vmem:[%s23 + $0xd8] sm:$0xff]
  %v556 = vld [vmem:[%s23 + $0xe0] sm:$0xff]
  %v557 = vld [vmem:[%s23 + $0xe8] sm:$0xff]
  %v558 = vld [vmem:[%s23 + $0xf0] sm:$0xff]
  %v559 = vld [vmem:[%s23 + $0xf8] sm:$0xff]
  %v560 = vld [vmem:[%s23 + $0x100] sm:$0xff]
  %v561 = vld [vmem:[%s23 + $0x108] sm:$0xff]
  %v562 = vld [vmem:[%s23 + $0x110] sm:$0xff]
  %v563 = vld [vmem:[%s23 + $0x118] sm:$0xff]
  %v564 = vld [vmem:[%s23 + $0x120] sm:$0xff]
  %v565 = vld [vmem:[%s23 + $0x128] sm:$0xff]
  %v566 = vld [vmem:[%s23 + $0x130] sm:$0xff]
  %v567 = vld [vmem:[%s23 + $0x138] sm:$0xff]
  %v568 = vld [vmem:[%s23 + $0x140] sm:$0xff]
  %v569 = vld [vmem:[%s23 + $0x148] sm:$0xff]
  %v570 = vld [vmem:[%s23 + $0x150] sm:$0xff]
  %v571 = vld [vmem:[%s23 + $0x158] sm:$0xff]
  %v572 = vld [vmem:[%s23 + $0x160] sm:$0xff]
  %v573 = vld [vmem:[%s23 + $0x168] sm:$0xff]
  %v574 = vld [vmem:[%s23 + $0x170] sm:$0xff]
  %v575 = vld [vmem:[%s23 + $0x178] sm:$0xff]
  %v576 = vld [vmem:[%s23 + $0x180] sm:$0xff]
  %v577 = vld [vmem:[%s23 + $0x188] sm:$0xff]
  %v578 = vld [vmem:[%s23 + $0x190] sm:$0xff]
  %v579 = vld [vmem:[%s23 + $0x198] sm:$0xff]
  %v580 = vld [vmem:[%s23 + $0x1a0] sm:$0xff]
  %v581 = vld [vmem:[%s23 + $0x1a8] sm:$0xff]
  %v582 = vld [vmem:[%s23 + $0x1b0] sm:$0xff]
  %v583 = vld [vmem:[%s23 + $0x1b8] sm:$0xff]
  %v584 = vld [vmem:[%s23 + $0x1c0] sm:$0xff]
  %v585 = vld [vmem:[%s23 + $0x1c8] sm:$0xff]
  %v586 = vld [vmem:[%s23 + $0x1d0] sm:$0xff]
  %v587 = vld [vmem:[%s23 + $0x1d8] sm:$0xff]
  %v588 = vld [vmem:[%s23 + $0x1e0] sm:$0xff]
  %v589 = vld [vmem:[%s23 + $0x1e8] sm:$0xff]
  %v590 = vld [vmem:[%s23 + $0x1f0] sm:$0xff]
  %v591 = vld [vmem:[%s23 + $0x1f8] sm:$0xff]
  %v592 = vld [vmem:[%s23 + $0x200] sm:$0xff]
  %v593 = vld [vmem:[%s23 + $0x208] sm:$0xff]
  %v594 = vld [vmem:[%s23 + $0x210] sm:$0xff]
  %v595 = vld [vmem:[%s23 + $0x218] sm:$0xff]
  %v596 = vld [vmem:[%s23 + $0x220] sm:$0xff]
  %v597 = vld [vmem:[%s23 + $0x228] sm:$0xff]
  %v598 = vld [vmem:[%s23 + $0x230] sm:$0xff]
  %v599 = vld [vmem:[%s23 + $0x238] sm:$0xff]
  %v600 = vld [vmem:[%s23 + $0x240] sm:$0xff]
  %v601 = vld [vmem:[%s23 + $0x248] sm:$0xff]
  %v602 = vld [vmem:[%s23 + $0x250] sm:$0xff]
  %v603 = vld [vmem:[%s23 + $0x258] sm:$0xff]
  %v604 = vld [vmem:[%s23 + $0x260] sm:$0xff]
  %v605 = vld [vmem:[%s23 + $0x268] sm:$0xff]
  %v606 = vld [vmem:[%s23 + $0x270] sm:$0xff]
  %v607 = vld [vmem:[%s23 + $0x278] sm:$0xff]
  %v608 = vld [vmem:[%s23 + $0x280] sm:$0xff]
  %v609 = vld [vmem:[%s23 + $0x288] sm:$0xff]
  %v610 = vld [vmem:[%s23 + $0x290] sm:$0xff]
  %v611 = vld [vmem:[%s23 + $0x298] sm:$0xff]
  %v612 = vld [vmem:[%s23 + $0x2a0] sm:$0xff]
  %v613 = vld [vmem:[%s23 + $0x2a8] sm:$0xff]
  %v614 = vld [vmem:[%s23 + $0x2b0] sm:$0xff]
  %v615 = vld [vmem:[%s23 + $0x2b8] sm:$0xff]
  %v616 = vld [vmem:[%s23 + $0x2c0] sm:$0xff]
  %v617 = vld [vmem:[%s23 + $0x2c8] sm:$0xff]
  %v618 = vld [vmem:[%s23 + $0x2d0] sm:$0xff]
  %v619 = vld [vmem:[%s23 + $0x2d8] sm:$0xff]
  %v620 = vld [vmem:[%s23 + $0x2e0] sm:$0xff]
  %v621 = vld [vmem:[%s23 + $0x2e8] sm:$0xff]
  %v622 = vld [vmem:[%s23 + $0x2f0] sm:$0xff]
  %v623 = vld [vmem:[%s23 + $0x2f8] sm:$0xff]
  %v624 = vld [vmem:[%s23 + $0x300] sm:$0xff]
  %v625 = vld [vmem:[%s23 + $0x308] sm:$0xff]
  %v626 = vld [vmem:[%s23 + $0x310] sm:$0xff]
  %v627 = vld [vmem:[%s23 + $0x318] sm:$0xff]
  %v628 = vld [vmem:[%s23 + $0x320] sm:$0xff]
  %v629 = vld [vmem:[%s23 + $0x328] sm:$0xff]
  %v630 = vld [vmem:[%s23 + $0x330] sm:$0xff]
  %v631 = vld [vmem:[%s23 + $0x338] sm:$0xff]
  %v632 = vld [vmem:[%s23 + $0x340] sm:$0xff]
  %v633 = vld [vmem:[%s23 + $0x348] sm:$0xff]
  %v634 = vld [vmem:[%s23 + $0x350] sm:$0xff]
  %v635 = vld [vmem:[%s23 + $0x358] sm:$0xff]
  %v636 = vld [vmem:[%s23 + $0x360] sm:$0xff]
  %v637 = vld [vmem:[%s23 + $0x368] sm:$0xff]
  %v638 = vld [vmem:[%s23 + $0x370] sm:$0xff]
  %v639 = vld [vmem:[%s23 + $0x378] sm:$0xff]
  %v640 = vld [vmem:[%s23 + $0x380] sm:$0xff]
  %v641 = vld [vmem:[%s23 + $0x388] sm:$0xff]
  %v642 = vld [vmem:[%s23 + $0x390] sm:$0xff]
  %v643 = vld [vmem:[%s23 + $0x398] sm:$0xff]
  %v644 = vld [vmem:[%s23 + $0x3a0] sm:$0xff]
  %v645 = vld [vmem:[%s23 + $0x3a8] sm:$0xff]
  %v646 = vld [vmem:[%s23 + $0x3b0] sm:$0xff]
  %v647 = vld [vmem:[%s23 + $0x3b8] sm:$0xff]
  %v648 = vld [vmem:[%s23 + $0x3c0] sm:$0xff]
  %v649 = vld [vmem:[%s23 + $0x3c8] sm:$0xff]
  %v650 = vld [vmem:[%s23 + $0x3d0] sm:$0xff]
  %v651 = vld [vmem:[%s23 + $0x3d8] sm:$0xff]
  %v652 = vld [vmem:[%s23 + $0x3e0] sm:$0xff]
  %v653 = vld [vmem:[%s23 + $0x3e8] sm:$0xff]
  %v654 = vld [vmem:[%s23 + $0x3f0] sm:$0xff]
  %v655 = vld [vmem:[%s23 + $0x3f8] sm:$0xff]
  %v656 = vld [vmem:[%s25] sm:$0x1]
  %v658 = vlaneseq
  %v659 = vshrl.u32 %v658, 7
  %v660 = vsub.s32 0, %v659
  %v661 = vrot.slane %v656, %v660
  %663 = vmatprep.subr.mxu0 0.0
  %664 = vmatpush1.msra.mxu0 %v543
  %665 = vmatprep.subr.mxu0 0.0
  %666 = vmatpush1.msra.mxu0 %v542
  %667 = vmatprep.subr.mxu0 0.0
  %668 = vmatpush1.msra.mxu0 %v541
  %669 = vmatprep.subr.mxu0 0.0
  %670 = vmatpush1.msra.mxu0 %v540
  %671 = vmatprep.subr.mxu0 0.0
  %672 = vmatpush1.msra.mxu0 %v539
  %673 = vmatprep.subr.mxu0 0.0
  %674 = vmatpush1.msra.mxu0 %v538
  %675 = vmatprep.subr.mxu0 0.0
  %676 = vmatpush1.msra.mxu0 %v537
  %677 = vmatprep.subr.mxu0 0.0
  %678 = vmatpush1.msra.mxu0 %v536
  %679 = vmatprep.subr.mxu0 0.0
  %680 = vmatpush1.msra.mxu0 %v535
  %681 = vmatprep.subr.mxu0 0.0
  %682 = vmatpush1.msra.mxu0 %v534
  %683 = vmatprep.subr.mxu0 0.0
  %684 = vmatpush1.msra.mxu0 %v533
  %685 = vmatprep.subr.mxu0 0.0
  %686 = vmatpush1.msra.mxu0 %v532
  %687 = vmatprep.subr.mxu0 0.0
  %688 = vmatpush1.msra.mxu0 %v531
  %689 = vmatprep.subr.mxu0 0.0
  %690 = vmatpush1.msra.mxu0 %v530
  %691 = vmatprep.subr.mxu0 0.0
  %692 = vmatpush1.msra.mxu0 %v529
  %693 = vmatprep.subr.mxu0 0.0
  %694 = vmatpush1.msra.mxu0 %v528
  %695 = vmatprep.subr.mxu0 0.0
  %696 = vmatpush2.msra.mxu0 %v559
  %697 = vmatprep.subr.mxu0 0.0
  %698 = vmatpush2.msra.mxu0 %v558
  %699 = vmatprep.subr.mxu0 0.0
  %700 = vmatpush2.msra.mxu0 %v557
  %701 = vmatprep.subr.mxu0 0.0
  %702 = vmatpush2.msra.mxu0 %v556
  %703 = vmatprep.subr.mxu0 0.0
  %704 = vmatpush2.msra.mxu0 %v555
  %705 = vmatprep.subr.mxu0 0.0
  %706 = vmatpush2.msra.mxu0 %v554
  %707 = vmatprep.subr.mxu0 0.0
  %708 = vmatpush2.msra.mxu0 %v553
  %709 = vmatprep.subr.mxu0 0.0
  %710 = vmatpush2.msra.mxu0 %v552
  %711 = vmatprep.subr.mxu0 0.0
  %712 = vmatpush2.msra.mxu0 %v551
  %713 = vmatprep.subr.mxu0 0.0
  %714 = vmatpush2.msra.mxu0 %v550
  %715 = vmatprep.subr.mxu0 0.0
  %716 = vmatpush2.msra.mxu0 %v549
  %717 = vmatprep.subr.mxu0 0.0
  %718 = vmatpush2.msra.mxu0 %v548
  %719 = vmatprep.subr.mxu0 0.0
  %720 = vmatpush2.msra.mxu0 %v547
  %721 = vmatprep.subr.mxu0 0.0
  %722 = vmatpush2.msra.mxu0 %v546
  %723 = vmatprep.subr.mxu0 0.0
  %724 = vmatpush2.msra.mxu0 %v545
  %725 = vmatprep.subr.mxu0 0.0
  %726 = vmatpush2.msra.mxu0 %v544
  %727 = vmatprep.mubr.f32.mxu0 %v513
  %728 = vmatmul.mubr.f32.gmra.mxu0 %v512
  %v729 = vpop.f32.mrf.mxu0
  %v730 = vadd.f32 %v661, %v729
  %v731 = vpop.f32.mrf.mxu0
  %732 = vmatprep.mubr.f32.mxu0 %v521
  %733 = vmatmul.mubr.f32.gmra.mxu0 %v520
  %v734 = vpop.f32.mrf.mxu0
  %v735 = vadd.f32 %v661, %v734
  %v736 = vpop.f32.mrf.mxu0
  %737 = vdwg.mxu0
  %738 = vmatprep.subr.mxu0 0.0
  %739 = vmatpush1.msra.mxu0 %v575
  %740 = vmatprep.subr.mxu0 0.0
  %741 = vmatpush1.msra.mxu0 %v574
  %742 = vmatprep.subr.mxu0 0.0
  %743 = vmatpush1.msra.mxu0 %v573
  %744 = vmatprep.subr.mxu0 0.0
  %745 = vmatpush1.msra.mxu0 %v572
  %746 = vmatprep.subr.mxu0 0.0
  %747 = vmatpush1.msra.mxu0 %v571
  %748 = vmatprep.subr.mxu0 0.0
  %749 = vmatpush1.msra.mxu0 %v570
  %750 = vmatprep.subr.mxu0 0.0
  %751 = vmatpush1.msra.mxu0 %v569
  %752 = vmatprep.subr.mxu0 0.0
  %753 = vmatpush1.msra.mxu0 %v568
  %754 = vmatprep.subr.mxu0 0.0
  %755 = vmatpush1.msra.mxu0 %v567
  %756 = vmatprep.subr.mxu0 0.0
  %757 = vmatpush1.msra.mxu0 %v566
  %758 = vmatprep.subr.mxu0 0.0
  %759 = vmatpush1.msra.mxu0 %v565
  %760 = vmatprep.subr.mxu0 0.0
  %761 = vmatpush1.msra.mxu0 %v564
  %762 = vmatprep.subr.mxu0 0.0
  %763 = vmatpush1.msra.mxu0 %v563
  %764 = vmatprep.subr.mxu0 0.0
  %765 = vmatpush1.msra.mxu0 %v562
  %766 = vmatprep.subr.mxu0 0.0
  %767 = vmatpush1.msra.mxu0 %v561
  %768 = vmatprep.subr.mxu0 0.0
  %769 = vmatpush1.msra.mxu0 %v560
  %770 = vmatprep.subr.mxu0 0.0
  %771 = vmatpush2.msra.mxu0 %v591
  %772 = vmatprep.subr.mxu0 0.0
  %773 = vmatpush2.msra.mxu0 %v590
  %774 = vmatprep.subr.mxu0 0.0
  %775 = vmatpush2.msra.mxu0 %v589
  %776 = vmatprep.subr.mxu0 0.0
  %777 = vmatpush2.msra.mxu0 %v588
  %778 = vmatprep.subr.mxu0 0.0
  %779 = vmatpush2.msra.mxu0 %v587
  %780 = vmatprep.subr.mxu0 0.0
  %781 = vmatpush2.msra.mxu0 %v586
  %782 = vmatprep.subr.mxu0 0.0
  %783 = vmatpush2.msra.mxu0 %v585
  %784 = vmatprep.subr.mxu0 0.0
  %785 = vmatpush2.msra.mxu0 %v584
  %786 = vmatprep.subr.mxu0 0.0
  %787 = vmatpush2.msra.mxu0 %v583
  %788 = vmatprep.subr.mxu0 0.0
  %789 = vmatpush2.msra.mxu0 %v582
  %790 = vmatprep.subr.mxu0 0.0
  %791 = vmatpush2.msra.mxu0 %v581
  %792 = vmatprep.subr.mxu0 0.0
  %793 = vmatpush2.msra.mxu0 %v580
  %794 = vmatprep.subr.mxu0 0.0
  %795 = vmatpush2.msra.mxu0 %v579
  %796 = vmatprep.subr.mxu0 0.0
  %797 = vmatpush2.msra.mxu0 %v578
  %798 = vmatprep.subr.mxu0 0.0
  %799 = vmatpush2.msra.mxu0 %v577
  %800 = vmatprep.subr.mxu0 0.0
  %801 = vmatpush2.msra.mxu0 %v576
  %802 = vmatprep.mubr.f32.mxu0 %v515
  %803 = vmatmul.mubr.f32.gmra.mxu0 %v514
  %v804 = vpop.f32.mrf.mxu0
  %v805 = vadd.f32 %v730, %v804
  %v806 = vpop.f32.mrf.mxu0
  %807 = vmatprep.mubr.f32.mxu0 %v523
  %808 = vmatmul.mubr.f32.gmra.mxu0 %v522
  %v809 = vpop.f32.mrf.mxu0
  %v810 = vadd.f32 %v735, %v809
  %v811 = vpop.f32.mrf.mxu0
  %812 = vdwg.mxu0
  %813 = vmatprep.subr.mxu0 0.0
  %814 = vmatpush1.msra.mxu0 %v607
  %815 = vmatprep.subr.mxu0 0.0
  %816 = vmatpush1.msra.mxu0 %v606
  %817 = vmatprep.subr.mxu0 0.0
  %818 = vmatpush1.msra.mxu0 %v605
  %819 = vmatprep.subr.mxu0 0.0
  %820 = vmatpush1.msra.mxu0 %v604
  %821 = vmatprep.subr.mxu0 0.0
  %822 = vmatpush1.msra.mxu0 %v603
  %823 = vmatprep.subr.mxu0 0.0
  %824 = vmatpush1.msra.mxu0 %v602
  %825 = vmatprep.subr.mxu0 0.0
  %826 = vmatpush1.msra.mxu0 %v601
  %827 = vmatprep.subr.mxu0 0.0
  %828 = vmatpush1.msra.mxu0 %v600
  %829 = vmatprep.subr.mxu0 0.0
  %830 = vmatpush1.msra.mxu0 %v599
  %831 = vmatprep.subr.mxu0 0.0
  %832 = vmatpush1.msra.mxu0 %v598
  %833 = vmatprep.subr.mxu0 0.0
  %834 = vmatpush1.msra.mxu0 %v597
  %835 = vmatprep.subr.mxu0 0.0
  %836 = vmatpush1.msra.mxu0 %v596
  %837 = vmatprep.subr.mxu0 0.0
  %838 = vmatpush1.msra.mxu0 %v595
  %839 = vmatprep.subr.mxu0 0.0
  %840 = vmatpush1.msra.mxu0 %v594
  %841 = vmatprep.subr.mxu0 0.0
  %842 = vmatpush1.msra.mxu0 %v593
  %843 = vmatprep.subr.mxu0 0.0
  %844 = vmatpush1.msra.mxu0 %v592
  %845 = vmatprep.subr.mxu0 0.0
  %846 = vmatpush2.msra.mxu0 %v623
  %847 = vmatprep.subr.mxu0 0.0
  %848 = vmatpush2.msra.mxu0 %v622
  %849 = vmatprep.subr.mxu0 0.0
  %850 = vmatpush2.msra.mxu0 %v621
  %851 = vmatprep.subr.mxu0 0.0
  %852 = vmatpush2.msra.mxu0 %v620
  %853 = vmatprep.subr.mxu0 0.0
  %854 = vmatpush2.msra.mxu0 %v619
  %855 = vmatprep.subr.mxu0 0.0
  %856 = vmatpush2.msra.mxu0 %v618
  %857 = vmatprep.subr.mxu0 0.0
  %858 = vmatpush2.msra.mxu0 %v617
  %859 = vmatprep.subr.mxu0 0.0
  %860 = vmatpush2.msra.mxu0 %v616
  %861 = vmatprep.subr.mxu0 0.0
  %862 = vmatpush2.msra.mxu0 %v615
  %863 = vmatprep.subr.mxu0 0.0
  %864 = vmatpush2.msra.mxu0 %v614
  %865 = vmatprep.subr.mxu0 0.0
  %866 = vmatpush2.msra.mxu0 %v613
  %867 = vmatprep.subr.mxu0 0.0
  %868 = vmatpush2.msra.mxu0 %v612
  %869 = vmatprep.subr.mxu0 0.0
  %870 = vmatpush2.msra.mxu0 %v611
  %871 = vmatprep.subr.mxu0 0.0
  %872 = vmatpush2.msra.mxu0 %v610
  %873 = vmatprep.subr.mxu0 0.0
  %874 = vmatpush2.msra.mxu0 %v609
  %875 = vmatprep.subr.mxu0 0.0
  %876 = vmatpush2.msra.mxu0 %v608
  %877 = vmatprep.mubr.f32.mxu0 %v517
  %878 = vmatmul.mubr.f32.gmra.mxu0 %v516
  %v879 = vpop.f32.mrf.mxu0
  %v880 = vadd.f32 %v805, %v879
  %v881 = vpop.f32.mrf.mxu0
  %882 = vmatprep.mubr.f32.mxu0 %v525
  %883 = vmatmul.mubr.f32.gmra.mxu0 %v524
  %v884 = vpop.f32.mrf.mxu0
  %v885 = vadd.f32 %v810, %v884
  %v886 = vpop.f32.mrf.mxu0
  %887 = vdwg.mxu0
  %888 = vmatprep.subr.mxu0 0.0
  %889 = vmatpush1.msra.mxu0 %v639
  %890 = vmatprep.subr.mxu0 0.0
  %891 = vmatpush1.msra.mxu0 %v638
  %892 = vmatprep.subr.mxu0 0.0
  %893 = vmatpush1.msra.mxu0 %v637
  %894 = vmatprep.subr.mxu0 0.0
  %895 = vmatpush1.msra.mxu0 %v636
  %896 = vmatprep.subr.mxu0 0.0
  %897 = vmatpush1.msra.mxu0 %v635
  %898 = vmatprep.subr.mxu0 0.0
  %899 = vmatpush1.msra.mxu0 %v634
  %900 = vmatprep.subr.mxu0 0.0
  %901 = vmatpush1.msra.mxu0 %v633
  %902 = vmatprep.subr.mxu0 0.0
  %903 = vmatpush1.msra.mxu0 %v632
  %904 = vmatprep.subr.mxu0 0.0
  %905 = vmatpush1.msra.mxu0 %v631
  %906 = vmatprep.subr.mxu0 0.0
  %907 = vmatpush1.msra.mxu0 %v630
  %908 = vmatprep.subr.mxu0 0.0
  %909 = vmatpush1.msra.mxu0 %v629
  %910 = vmatprep.subr.mxu0 0.0
  %911 = vmatpush1.msra.mxu0 %v628
  %912 = vmatprep.subr.mxu0 0.0
  %913 = vmatpush1.msra.mxu0 %v627
  %914 = vmatprep.subr.mxu0 0.0
  %915 = vmatpush1.msra.mxu0 %v626
  %916 = vmatprep.subr.mxu0 0.0
  %917 = vmatpush1.msra.mxu0 %v625
  %918 = vmatprep.subr.mxu0 0.0
  %919 = vmatpush1.msra.mxu0 %v624
  %920 = vmatprep.subr.mxu0 0.0
  %921 = vmatpush2.msra.mxu0 %v655
  %922 = vmatprep.subr.mxu0 0.0
  %923 = vmatpush2.msra.mxu0 %v654
  %924 = vmatprep.subr.mxu0 0.0
  %925 = vmatpush2.msra.mxu0 %v653
  %926 = vmatprep.subr.mxu0 0.0
  %927 = vmatpush2.msra.mxu0 %v652
  %928 = vmatprep.subr.mxu0 0.0
  %929 = vmatpush2.msra.mxu0 %v651
  %930 = vmatprep.subr.mxu0 0.0
  %931 = vmatpush2.msra.mxu0 %v650
  %932 = vmatprep.subr.mxu0 0.0
  %933 = vmatpush2.msra.mxu0 %v649
  %934 = vmatprep.subr.mxu0 0.0
  %935 = vmatpush2.msra.mxu0 %v648
  %936 = vmatprep.subr.mxu0 0.0
  %937 = vmatpush2.msra.mxu0 %v647
  %938 = vmatprep.subr.mxu0 0.0
  %939 = vmatpush2.msra.mxu0 %v646
  %940 = vmatprep.subr.mxu0 0.0
  %941 = vmatpush2.msra.mxu0 %v645
  %942 = vmatprep.subr.mxu0 0.0
  %943 = vmatpush2.msra.mxu0 %v644
  %944 = vmatprep.subr.mxu0 0.0
  %945 = vmatpush2.msra.mxu0 %v643
  %946 = vmatprep.subr.mxu0 0.0
  %947 = vmatpush2.msra.mxu0 %v642
  %948 = vmatprep.subr.mxu0 0.0
  %949 = vmatpush2.msra.mxu0 %v641
  %950 = vmatprep.subr.mxu0 0.0
  %951 = vmatpush2.msra.mxu0 %v640
  %952 = vmatprep.mubr.f32.mxu0 %v519
  %953 = vmatmul.mubr.f32.gmra.mxu0 %v518
  %v954 = vpop.f32.mrf.mxu0
  %v955 = vadd.f32 %v880, %v954
  %v956 = vpop.f32.mrf.mxu0
  %957 = vmatprep.mubr.f32.mxu0 %v527
  %958 = vmatmul.mubr.f32.gmra.mxu0 %v526
  %v959 = vpop.f32.mrf.mxu0
  %v960 = vadd.f32 %v885, %v959
  %v961 = vpop.f32.mrf.mxu0
  %962 = vdwg.mxu0
  %v963 = vld [vmem:[%s27] sm:$0xff]
  %v964 = vld [vmem:[%s27 + $0x8] sm:$0xff]
  %v965 = vld [vmem:[%s27 + $0x10] sm:$0xff]
  %v966 = vld [vmem:[%s27 + $0x18] sm:$0xff]
  %v967 = vld [vmem:[%s29] sm:$0x1]
  %v969 = vlaneseq
  %v970 = vshrl.u32 %v969, 7
  %v971 = vsub.s32 0, %v970
  %v972 = vrot.slane %v967, %v971
  %v975 = vsel %vm234, %v955, 0
  %v978 = vsel %vm234, %v960, 0
  %980 = vmatprep.subr.mxu0 0.0
  %981 = vmatpush1.msra.mxu0 0.0
  %982 = vmatprep.subr.mxu0 0.0
  %983 = vmatpush1.msra.mxu0 0.0
  %984 = vmatprep.subr.mxu0 0.0
  %985 = vmatpush1.msra.mxu0 0.0
  %986 = vmatprep.subr.mxu0 0.0
  %987 = vmatpush1.msra.mxu0 0.0
  %988 = vmatprep.subr.mxu0 0.0
  %989 = vmatpush1.msra.mxu0 0.0
  %990 = vmatprep.subr.mxu0 0.0
  %991 = vmatpush1.msra.mxu0 0.0
  %992 = vmatprep.subr.mxu0 0.0
  %993 = vmatpush1.msra.mxu0 0.0
  %994 = vmatprep.subr.mxu0 0.0
  %995 = vmatpush1.msra.mxu0 0.0
  %996 = vmatprep.subr.mxu0 0.0
  %997 = vmatpush1.msra.mxu0 0.0
  %998 = vmatprep.subr.mxu0 0.0
  %999 = vmatpush1.msra.mxu0 0.0
  %1000 = vmatprep.subr.mxu0 0.0
  %1001 = vmatpush1.msra.mxu0 0.0
  %1002 = vmatprep.subr.mxu0 0.0
  %1003 = vmatpush1.msra.mxu0 0.0
  %1004 = vmatprep.subr.mxu0 0.0
  %1005 = vmatpush1.msra.mxu0 %v966
  %1006 = vmatprep.subr.mxu0 0.0
  %1007 = vmatpush1.msra.mxu0 %v965
  %1008 = vmatprep.subr.mxu0 0.0
  %1009 = vmatpush1.msra.mxu0 %v964
  %1010 = vmatprep.subr.mxu0 0.0
  %1011 = vmatpush1.msra.mxu0 %v963
  %1012 = vmatprep.subr.mxu0 0.0
  %1013 = vmatpush2.msra.mxu0 0.0
  %1014 = vmatprep.subr.mxu0 0.0
  %1015 = vmatpush2.msra.mxu0 0.0
  %1016 = vmatprep.subr.mxu0 0.0
  %1017 = vmatpush2.msra.mxu0 0.0
  %1018 = vmatprep.subr.mxu0 0.0
  %1019 = vmatpush2.msra.mxu0 0.0
  %1020 = vmatprep.subr.mxu0 0.0
  %1021 = vmatpush2.msra.mxu0 0.0
  %1022 = vmatprep.subr.mxu0 0.0
  %1023 = vmatpush2.msra.mxu0 0.0
  %1024 = vmatprep.subr.mxu0 0.0
  %1025 = vmatpush2.msra.mxu0 0.0
  %1026 = vmatprep.subr.mxu0 0.0
  %1027 = vmatpush2.msra.mxu0 0.0
  %1028 = vmatprep.subr.mxu0 0.0
  %1029 = vmatpush2.msra.mxu0 0.0
  %1030 = vmatprep.subr.mxu0 0.0
  %1031 = vmatpush2.msra.mxu0 0.0
  %1032 = vmatprep.subr.mxu0 0.0
  %1033 = vmatpush2.msra.mxu0 0.0
  %1034 = vmatprep.subr.mxu0 0.0
  %1035 = vmatpush2.msra.mxu0 0.0
  %1036 = vmatprep.subr.mxu0 0.0
  %1037 = vmatpush2.msra.mxu0 0.0
  %1038 = vmatprep.subr.mxu0 0.0
  %1039 = vmatpush2.msra.mxu0 0.0
  %1040 = vmatprep.subr.mxu0 0.0
  %1041 = vmatpush2.msra.mxu0 0.0
  %1042 = vmatprep.subr.mxu0 0.0
  %1043 = vmatpush2.msra.mxu0 0.0
  %1044 = vmatprep.mubr.f32.mxu0 0.0
  %1045 = vmatmul.mubr.f32.gmra.mxu0 %v975
  %v1046 = vpop.f32.mrf.mxu0
  %v1047 = vadd.f32 %v972, %v1046
  %v1048 = vpop.f32.mrf.mxu0
  %1049 = vmatprep.mubr.f32.mxu0 0.0
  %1050 = vmatmul.mubr.f32.gmra.mxu0 %v978
  %v1051 = vpop.f32.mrf.mxu0
  %v1052 = vadd.f32 %v972, %v1051
  %v1053 = vpop.f32.mrf.mxu0
  %1054 = vdwg.mxu0
  %v1055 = vmax.f32 %v1047, 0.0
  %v1056 = vmax.f32 %v1052, 0.0
  %v1057 = vadd.f32 %v1055, %v955
  %v1058 = vadd.f32 %v1056, %v960
  %v1059 = vld [vmem:[%s31] sm:$0xff]
  %v1060 = vld [vmem:[%s31 + $0x8] sm:$0xff]
  %v1061 = vld [vmem:[%s31 + $0x10] sm:$0xff]
  %v1062 = vld [vmem:[%s31 + $0x18] sm:$0xff]
  %v1063 = vld [vmem:[%s33] sm:$0xff]
  %v1064 = vld [vmem:[%s33 + $0x8] sm:$0xff]
  %v1065 = vld [vmem:[%s33 + $0x10] sm:$0xff]
  %v1066 = vld [vmem:[%s33 + $0x18] sm:$0xff]
  %v1068 = vsel %vm234, %v510, 0
  %v1071 = vsel %vm234, %v511, 0
  %1073 = vmatprep.subr.mxu0 0.0
  %1074 = vmatpush1.msra.mxu0 0.0
  %1075 = vmatprep.subr.mxu0 0.0
  %1076 = vmatpush1.msra.mxu0 0.0
  %1077 = vmatprep.subr.mxu0 0.0
  %1078 = vmatpush1.msra.mxu0 0.0
  %1079 = vmatprep.subr.mxu0 0.0
  %1080 = vmatpush1.msra.mxu0 0.0
  %1081 = vmatprep.subr.mxu0 0.0
  %1082 = vmatpush1.msra.mxu0 0.0
  %1083 = vmatprep.subr.mxu0 0.0
  %1084 = vmatpush1.msra.mxu0 0.0
  %1085 = vmatprep.subr.mxu0 0.0
  %1086 = vmatpush1.msra.mxu0 0.0
  %1087 = vmatprep.subr.mxu0 0.0
  %1088 = vmatpush1.msra.mxu0 0.0
  %1089 = vmatprep.subr.mxu0 0.0
  %1090 = vmatpush1.msra.mxu0 0.0
  %1091 = vmatprep.subr.mxu0 0.0
  %1092 = vmatpush1.msra.mxu0 0.0
  %1093 = vmatprep.subr.mxu0 0.0
  %1094 = vmatpush1.msra.mxu0 0.0
  %1095 = vmatprep.subr.mxu0 0.0
  %1096 = vmatpush1.msra.mxu0 0.0
  %1097 = vmatprep.subr.mxu0 0.0
  %1098 = vmatpush1.msra.mxu0 %v1066
  %1099 = vmatprep.subr.mxu0 0.0
  %1100 = vmatpush1.msra.mxu0 %v1065
  %1101 = vmatprep.subr.mxu0 0.0
  %1102 = vmatpush1.msra.mxu0 %v1064
  %1103 = vmatprep.subr.mxu0 0.0
  %1104 = vmatpush1.msra.mxu0 %v1063
  %1105 = vmatprep.subr.mxu0 0.0
  %1106 = vmatpush2.msra.mxu0 0.0
  %1107 = vmatprep.subr.mxu0 0.0
  %1108 = vmatpush2.msra.mxu0 0.0
  %1109 = vmatprep.subr.mxu0 0.0
  %1110 = vmatpush2.msra.mxu0 0.0
  %1111 = vmatprep.subr.mxu0 0.0
  %1112 = vmatpush2.msra.mxu0 0.0
  %1113 = vmatprep.subr.mxu0 0.0
  %1114 = vmatpush2.msra.mxu0 0.0
  %1115 = vmatprep.subr.mxu0 0.0
  %1116 = vmatpush2.msra.mxu0 0.0
  %1117 = vmatprep.subr.mxu0 0.0
  %1118 = vmatpush2.msra.mxu0 0.0
  %1119 = vmatprep.subr.mxu0 0.0
  %1120 = vmatpush2.msra.mxu0 0.0
  %1121 = vmatprep.subr.mxu0 0.0
  %1122 = vmatpush2.msra.mxu0 0.0
  %1123 = vmatprep.subr.mxu0 0.0
  %1124 = vmatpush2.msra.mxu0 0.0
  %1125 = vmatprep.subr.mxu0 0.0
  %1126 = vmatpush2.msra.mxu0 0.0
  %1127 = vmatprep.subr.mxu0 0.0
  %1128 = vmatpush2.msra.mxu0 0.0
  %1129 = vmatprep.subr.mxu0 0.0
  %1130 = vmatpush2.msra.mxu0 0.0
  %1131 = vmatprep.subr.mxu0 0.0
  %1132 = vmatpush2.msra.mxu0 0.0
  %1133 = vmatprep.subr.mxu0 0.0
  %1134 = vmatpush2.msra.mxu0 0.0
  %1135 = vmatprep.subr.mxu0 0.0
  %1136 = vmatpush2.msra.mxu0 0.0
  %1137 = vmatprep.mubr.f32.mxu0 0.0
  %1138 = vmatmul.mubr.f32.gmra.mxu0 %v1068
  %v1139 = vpop.f32.mrf.mxu0
  %v1140 = vadd.f32 0.0, %v1139
  %v1141 = vpop.f32.mrf.mxu0
  %1142 = vmatprep.mubr.f32.mxu0 0.0
  %1143 = vmatmul.mubr.f32.gmra.mxu0 %v1071
  %v1144 = vpop.f32.mrf.mxu0
  %v1145 = vadd.f32 0.0, %v1144
  %v1146 = vpop.f32.mrf.mxu0
  %1147 = vdwg.mxu0
  %v1149 = vsel %vm234, %v318, 0
  %v1152 = vsel %vm234, %v319, 0
  %1154 = vmatprep.subr.mxu0 0.0
  %1155 = vmatpush1.msra.mxu0 0.0
  %1156 = vmatprep.subr.mxu0 0.0
  %1157 = vmatpush1.msra.mxu0 0.0
  %1158 = vmatprep.subr.mxu0 0.0
  %1159 = vmatpush1.msra.mxu0 0.0
  %1160 = vmatprep.subr.mxu0 0.0
  %1161 = vmatpush1.msra.mxu0 0.0
  %1162 = vmatprep.subr.mxu0 0.0
  %1163 = vmatpush1.msra.mxu0 0.0
  %1164 = vmatprep.subr.mxu0 0.0
  %1165 = vmatpush1.msra.mxu0 0.0
  %1166 = vmatprep.subr.mxu0 0.0
  %1167 = vmatpush1.msra.mxu0 0.0
  %1168 = vmatprep.subr.mxu0 0.0
  %1169 = vmatpush1.msra.mxu0 0.0
  %1170 = vmatprep.subr.mxu0 0.0
  %1171 = vmatpush1.msra.mxu0 0.0
  %1172 = vmatprep.subr.mxu0 0.0
  %1173 = vmatpush1.msra.mxu0 0.0
  %1174 = vmatprep.subr.mxu0 0.0
  %1175 = vmatpush1.msra.mxu0 0.0
  %1176 = vmatprep.subr.mxu0 0.0
  %1177 = vmatpush1.msra.mxu0 0.0
  %1178 = vmatprep.subr.mxu0 0.0
  %1179 = vmatpush1.msra.mxu0 %v1062
  %1180 = vmatprep.subr.mxu0 0.0
  %1181 = vmatpush1.msra.mxu0 %v1061
  %1182 = vmatprep.subr.mxu0 0.0
  %1183 = vmatpush1.msra.mxu0 %v1060
  %1184 = vmatprep.subr.mxu0 0.0
  %1185 = vmatpush1.msra.mxu0 %v1059
  %1186 = vmatprep.subr.mxu0 0.0
  %1187 = vmatpush2.msra.mxu0 0.0
  %1188 = vmatprep.subr.mxu0 0.0
  %1189 = vmatpush2.msra.mxu0 0.0
  %1190 = vmatprep.subr.mxu0 0.0
  %1191 = vmatpush2.msra.mxu0 0.0
  %1192 = vmatprep.subr.mxu0 0.0
  %1193 = vmatpush2.msra.mxu0 0.0
  %1194 = vmatprep.subr.mxu0 0.0
  %1195 = vmatpush2.msra.mxu0 0.0
  %1196 = vmatprep.subr.mxu0 0.0
  %1197 = vmatpush2.msra.mxu0 0.0
  %1198 = vmatprep.subr.mxu0 0.0
  %1199 = vmatpush2.msra.mxu0 0.0
  %1200 = vmatprep.subr.mxu0 0.0
  %1201 = vmatpush2.msra.mxu0 0.0
  %1202 = vmatprep.subr.mxu0 0.0
  %1203 = vmatpush2.msra.mxu0 0.0
  %1204 = vmatprep.subr.mxu0 0.0
  %1205 = vmatpush2.msra.mxu0 0.0
  %1206 = vmatprep.subr.mxu0 0.0
  %1207 = vmatpush2.msra.mxu0 0.0
  %1208 = vmatprep.subr.mxu0 0.0
  %1209 = vmatpush2.msra.mxu0 0.0
  %1210 = vmatprep.subr.mxu0 0.0
  %1211 = vmatpush2.msra.mxu0 0.0
  %1212 = vmatprep.subr.mxu0 0.0
  %1213 = vmatpush2.msra.mxu0 0.0
  %1214 = vmatprep.subr.mxu0 0.0
  %1215 = vmatpush2.msra.mxu0 0.0
  %1216 = vmatprep.subr.mxu0 0.0
  %1217 = vmatpush2.msra.mxu0 0.0
  %1218 = vmatprep.mubr.f32.mxu0 0.0
  %1219 = vmatmul.mubr.f32.gmra.mxu0 %v1149
  %v1220 = vpop.f32.mrf.mxu0
  %v1221 = vadd.f32 %v1140, %v1220
  %v1222 = vpop.f32.mrf.mxu0
  %1223 = vmatprep.mubr.f32.mxu0 0.0
  %1224 = vmatmul.mubr.f32.gmra.mxu0 %v1152
  %v1225 = vpop.f32.mrf.mxu0
  %v1226 = vadd.f32 %v1145, %v1225
  %v1227 = vpop.f32.mrf.mxu0
  %1228 = vdwg.mxu0
  %v1229 = vld [vmem:[%s35] sm:$0xff]
  %v1230 = vld [vmem:[%s35 + $0x8] sm:$0xff]
  %v1231 = vld [vmem:[%s35 + $0x10] sm:$0xff]
  %v1232 = vld [vmem:[%s35 + $0x18] sm:$0xff]
  %v1234 = vsel %vm234, %v1057, 0
  %v1237 = vsel %vm234, %v1058, 0
  %1239 = vmatprep.subr.mxu0 0.0
  %1240 = vmatpush1.msra.mxu0 0.0
  %1241 = vmatprep.subr.mxu0 0.0
  %1242 = vmatpush1.msra.mxu0 0.0
  %1243 = vmatprep.subr.mxu0 0.0
  %1244 = vmatpush1.msra.mxu0 0.0
  %1245 = vmatprep.subr.mxu0 0.0
  %1246 = vmatpush1.msra.mxu0 0.0
  %1247 = vmatprep.subr.mxu0 0.0
  %1248 = vmatpush1.msra.mxu0 0.0
  %1249 = vmatprep.subr.mxu0 0.0
  %1250 = vmatpush1.msra.mxu0 0.0
  %1251 = vmatprep.subr.mxu0 0.0
  %1252 = vmatpush1.msra.mxu0 0.0
  %1253 = vmatprep.subr.mxu0 0.0
  %1254 = vmatpush1.msra.mxu0 0.0
  %1255 = vmatprep.subr.mxu0 0.0
  %1256 = vmatpush1.msra.mxu0 0.0
  %1257 = vmatprep.subr.mxu0 0.0
  %1258 = vmatpush1.msra.mxu0 0.0
  %1259 = vmatprep.subr.mxu0 0.0
  %1260 = vmatpush1.msra.mxu0 0.0
  %1261 = vmatprep.subr.mxu0 0.0
  %1262 = vmatpush1.msra.mxu0 0.0
  %1263 = vmatprep.subr.mxu0 0.0
  %1264 = vmatpush1.msra.mxu0 %v1232
  %1265 = vmatprep.subr.mxu0 0.0
  %1266 = vmatpush1.msra.mxu0 %v1231
  %1267 = vmatprep.subr.mxu0 0.0
  %1268 = vmatpush1.msra.mxu0 %v1230
  %1269 = vmatprep.subr.mxu0 0.0
  %1270 = vmatpush1.msra.mxu0 %v1229
  %1271 = vmatprep.subr.mxu0 0.0
  %1272 = vmatpush2.msra.mxu0 0.0
  %1273 = vmatprep.subr.mxu0 0.0
  %1274 = vmatpush2.msra.mxu0 0.0
  %1275 = vmatprep.subr.mxu0 0.0
  %1276 = vmatpush2.msra.mxu0 0.0
  %1277 = vmatprep.subr.mxu0 0.0
  %1278 = vmatpush2.msra.mxu0 0.0
  %1279 = vmatprep.subr.mxu0 0.0
  %1280 = vmatpush2.msra.mxu0 0.0
  %1281 = vmatprep.subr.mxu0 0.0
  %1282 = vmatpush2.msra.mxu0 0.0
  %1283 = vmatprep.subr.mxu0 0.0
  %1284 = vmatpush2.msra.mxu0 0.0
  %1285 = vmatprep.subr.mxu0 0.0
  %1286 = vmatpush2.msra.mxu0 0.0
  %1287 = vmatprep.subr.mxu0 0.0
  %1288 = vmatpush2.msra.mxu0 0.0
  %1289 = vmatprep.subr.mxu0 0.0
  %1290 = vmatpush2.msra.mxu0 0.0
  %1291 = vmatprep.subr.mxu0 0.0
  %1292 = vmatpush2.msra.mxu0 0.0
  %1293 = vmatprep.subr.mxu0 0.0
  %1294 = vmatpush2.msra.mxu0 0.0
  %1295 = vmatprep.subr.mxu0 0.0
  %1296 = vmatpush2.msra.mxu0 0.0
  %1297 = vmatprep.subr.mxu0 0.0
  %1298 = vmatpush2.msra.mxu0 0.0
  %1299 = vmatprep.subr.mxu0 0.0
  %1300 = vmatpush2.msra.mxu0 0.0
  %1301 = vmatprep.subr.mxu0 0.0
  %1302 = vmatpush2.msra.mxu0 0.0
  %1303 = vmatprep.mubr.f32.mxu0 0.0
  %1304 = vmatmul.mubr.f32.gmra.mxu0 %v1234
  %v1305 = vpop.f32.mrf.mxu0
  %v1306 = vadd.f32 0.0, %v1305
  %v1307 = vpop.f32.mrf.mxu0
  %1308 = vmatprep.mubr.f32.mxu0 0.0
  %1309 = vmatmul.mubr.f32.gmra.mxu0 %v1237
  %v1310 = vpop.f32.mrf.mxu0
  %v1311 = vadd.f32 0.0, %v1310
  %v1312 = vpop.f32.mrf.mxu0
  %1313 = vdwg.mxu0
  %v1314 = vadd.f32 %v1221, %v1306
  %v1315 = vadd.f32 %v1226, %v1311
  %v1316 = vld [vmem:[%s37] sm:$0x1]
  %v1318 = vlaneseq
  %v1319 = vshrl.u32 %v1318, 7
  %v1320 = vsub.s32 0, %v1319
  %v1321 = vrot.slane %v1316, %v1320
  %v1323 = vadd.f32 %v1314, %v1321
  %v1324 = vadd.f32 %v1315, %v1321
  %v1325 = vld [vmem:[%s39] sm:$0xff]
  %v1326 = vld [vmem:[%s39 + $0x8] sm:$0xff]
  %v1327 = vld [vmem:[%s39 + $0x10] sm:$0xff]
  %v1328 = vld [vmem:[%s39 + $0x18] sm:$0xff]
  %v1329 = vld [vmem:[%s41] sm:$0x1]
  %v1331 = vlaneseq
  %v1332 = vshrl.u32 %v1331, 7
  %v1333 = vsub.s32 0, %v1332
  %v1334 = vrot.slane %v1329, %v1333
  %v1337 = vsel %vm234, %v1323, 0
  %v1340 = vsel %vm234, %v1324, 0
  %1342 = vmatprep.subr.mxu0 0.0
  %1343 = vmatpush1.msra.mxu0 0.0
  %1344 = vmatprep.subr.mxu0 0.0
  %1345 = vmatpush1.msra.mxu0 0.0
  %1346 = vmatprep.subr.mxu0 0.0
  %1347 = vmatpush1.msra.mxu0 0.0
  %1348 = vmatprep.subr.mxu0 0.0
  %1349 = vmatpush1.msra.mxu0 0.0
  %1350 = vmatprep.subr.mxu0 0.0
  %1351 = vmatpush1.msra.mxu0 0.0
  %1352 = vmatprep.subr.mxu0 0.0
  %1353 = vmatpush1.msra.mxu0 0.0
  %1354 = vmatprep.subr.mxu0 0.0
  %1355 = vmatpush1.msra.mxu0 0.0
  %1356 = vmatprep.subr.mxu0 0.0
  %1357 = vmatpush1.msra.mxu0 0.0
  %1358 = vmatprep.subr.mxu0 0.0
  %1359 = vmatpush1.msra.mxu0 0.0
  %1360 = vmatprep.subr.mxu0 0.0
  %1361 = vmatpush1.msra.mxu0 0.0
  %1362 = vmatprep.subr.mxu0 0.0
  %1363 = vmatpush1.msra.mxu0 0.0
  %1364 = vmatprep.subr.mxu0 0.0
  %1365 = vmatpush1.msra.mxu0 0.0
  %1366 = vmatprep.subr.mxu0 0.0
  %1367 = vmatpush1.msra.mxu0 %v1328
  %1368 = vmatprep.subr.mxu0 0.0
  %1369 = vmatpush1.msra.mxu0 %v1327
  %1370 = vmatprep.subr.mxu0 0.0
  %1371 = vmatpush1.msra.mxu0 %v1326
  %1372 = vmatprep.subr.mxu0 0.0
  %1373 = vmatpush1.msra.mxu0 %v1325
  %1374 = vmatprep.subr.mxu0 0.0
  %1375 = vmatpush2.msra.mxu0 0.0
  %1376 = vmatprep.subr.mxu0 0.0
  %1377 = vmatpush2.msra.mxu0 0.0
  %1378 = vmatprep.subr.mxu0 0.0
  %1379 = vmatpush2.msra.mxu0 0.0
  %1380 = vmatprep.subr.mxu0 0.0
  %1381 = vmatpush2.msra.mxu0 0.0
  %1382 = vmatprep.subr.mxu0 0.0
  %1383 = vmatpush2.msra.mxu0 0.0
  %1384 = vmatprep.subr.mxu0 0.0
  %1385 = vmatpush2.msra.mxu0 0.0
  %1386 = vmatprep.subr.mxu0 0.0
  %1387 = vmatpush2.msra.mxu0 0.0
  %1388 = vmatprep.subr.mxu0 0.0
  %1389 = vmatpush2.msra.mxu0 0.0
  %1390 = vmatprep.subr.mxu0 0.0
  %1391 = vmatpush2.msra.mxu0 0.0
  %1392 = vmatprep.subr.mxu0 0.0
  %1393 = vmatpush2.msra.mxu0 0.0
  %1394 = vmatprep.subr.mxu0 0.0
  %1395 = vmatpush2.msra.mxu0 0.0
  %1396 = vmatprep.subr.mxu0 0.0
  %1397 = vmatpush2.msra.mxu0 0.0
  %1398 = vmatprep.subr.mxu0 0.0
  %1399 = vmatpush2.msra.mxu0 0.0
  %1400 = vmatprep.subr.mxu0 0.0
  %1401 = vmatpush2.msra.mxu0 0.0
  %1402 = vmatprep.subr.mxu0 0.0
  %1403 = vmatpush2.msra.mxu0 0.0
  %1404 = vmatprep.subr.mxu0 0.0
  %1405 = vmatpush2.msra.mxu0 0.0
  %1406 = vmatprep.mubr.f32.mxu0 0.0
  %1407 = vmatmul.mubr.f32.gmra.mxu0 %v1337
  %v1408 = vpop.f32.mrf.mxu0
  %v1409 = vadd.f32 %v1334, %v1408
  %v1410 = vpop.f32.mrf.mxu0
  %1411 = vmatprep.mubr.f32.mxu0 0.0
  %1412 = vmatmul.mubr.f32.gmra.mxu0 %v1340
  %v1413 = vpop.f32.mrf.mxu0
  %v1414 = vadd.f32 %v1334, %v1413
  %v1415 = vpop.f32.mrf.mxu0
  %1416 = vdwg.mxu0
  %v1417 = vmax.f32 %v1409, 0.0
  %v1418 = vmax.f32 %v1414, 0.0
  %v1419 = vadd.f32 %v1417, %v1323
  %v1420 = vadd.f32 %v1418, %v1324
  %v1421 = vld [vmem:[%s43] sm:$0xff]
  %v1422 = vld [vmem:[%s43 + $0x8] sm:$0xff]
  %vm1423 = vcmask 130048
  %v1425 = vsel %vm1423, %v1421, 0
  %v1428 = vsel %vm1423, %v1422, 0
  %1430 = vmatprep.subr.mxu0 0.0
  %1431 = vmatpush1.msra.mxu0 0.0
  %1432 = vmatprep.subr.mxu0 0.0
  %1433 = vmatpush1.msra.mxu0 0.0
  %1434 = vmatprep.subr.mxu0 0.0
  %1435 = vmatpush1.msra.mxu0 0.0
  %1436 = vmatprep.subr.mxu0 0.0
  %1437 = vmatpush1.msra.mxu0 0.0
  %1438 = vmatprep.subr.mxu0 0.0
  %1439 = vmatpush1.msra.mxu0 0.0
  %1440 = vmatprep.subr.mxu0 0.0
  %1441 = vmatpush1.msra.mxu0 0.0
  %1442 = vmatprep.subr.mxu0 0.0
  %1443 = vmatpush1.msra.mxu0 0.0
  %1444 = vmatprep.subr.mxu0 0.0
  %1445 = vmatpush1.msra.mxu0 0.0
  %1446 = vmatprep.subr.mxu0 0.0
  %1447 = vmatpush1.msra.mxu0 0.0
  %1448 = vmatprep.subr.mxu0 0.0
  %1449 = vmatpush1.msra.mxu0 0.0
  %1450 = vmatprep.subr.mxu0 0.0
  %1451 = vmatpush1.msra.mxu0 0.0
  %1452 = vmatprep.subr.mxu0 0.0
  %1453 = vmatpush1.msra.mxu0 0.0
  %1454 = vmatprep.subr.mxu0 0.0
  %1455 = vmatpush1.msra.mxu0 0.0
  %1456 = vmatprep.subr.mxu0 0.0
  %1457 = vmatpush1.msra.mxu0 0.0
  %1458 = vmatprep.subr.mxu0 0.0
  %1459 = vmatpush1.msra.mxu0 %v1420
  %1460 = vmatprep.subr.mxu0 0.0
  %1461 = vmatpush1.msra.mxu0 %v1419
  %1462 = vmatprep.subr.mxu0 0.0
  %1463 = vmatpush2.msra.mxu0 0.0
  %1464 = vmatprep.subr.mxu0 0.0
  %1465 = vmatpush2.msra.mxu0 0.0
  %1466 = vmatprep.subr.mxu0 0.0
  %1467 = vmatpush2.msra.mxu0 0.0
  %1468 = vmatprep.subr.mxu0 0.0
  %1469 = vmatpush2.msra.mxu0 0.0
  %1470 = vmatprep.subr.mxu0 0.0
  %1471 = vmatpush2.msra.mxu0 0.0
  %1472 = vmatprep.subr.mxu0 0.0
  %1473 = vmatpush2.msra.mxu0 0.0
  %1474 = vmatprep.subr.mxu0 0.0
  %1475 = vmatpush2.msra.mxu0 0.0
  %1476 = vmatprep.subr.mxu0 0.0
  %1477 = vmatpush2.msra.mxu0 0.0
  %1478 = vmatprep.subr.mxu0 0.0
  %1479 = vmatpush2.msra.mxu0 0.0
  %1480 = vmatprep.subr.mxu0 0.0
  %1481 = vmatpush2.msra.mxu0 0.0
  %1482 = vmatprep.subr.mxu0 0.0
  %1483 = vmatpush2.msra.mxu0 0.0
  %1484 = vmatprep.subr.mxu0 0.0
  %1485 = vmatpush2.msra.mxu0 0.0
  %1486 = vmatprep.subr.mxu0 0.0
  %1487 = vmatpush2.msra.mxu0 0.0
  %1488 = vmatprep.subr.mxu0 0.0
  %1489 = vmatpush2.msra.mxu0 0.0
  %1490 = vmatprep.subr.mxu0 0.0
  %1491 = vmatpush2.msra.mxu0 0.0
  %1492 = vmatprep.subr.mxu0 0.0
  %1493 = vmatpush2.msra.mxu0 0.0
  %1494 = vmatprep.mubr.f32.mxu0 0.0
  %1495 = vmatmul.mubr.f32.gmra.mxu0 %v1425
  %v1496 = vpop.f32.mrf.mxu0
  %v1497 = vadd.f32 0.0, %v1496
  %v1498 = vpop.f32.mrf.mxu0
  %1499 = vmatprep.mubr.f32.mxu0 0.0
  %1500 = vmatmul.mubr.f32.gmra.mxu0 %v1428
  %v1501 = vpop.f32.mrf.mxu0
  %v1502 = vadd.f32 0.0, %v1501
  %v1503 = vpop.f32.mrf.mxu0
  %1504 = vdwg.mxu0
  %v1505 = vld [vmem:[%s45] sm:$0xff]
  %v1506 = vld [vmem:[%s45 + $0x8] sm:$0xff]
  %v1507 = vld [vmem:[%s45 + $0x10] sm:$0xff]
  %v1508 = vld [vmem:[%s45 + $0x18] sm:$0xff]
  %v1509 = vld [vmem:[%s47] sm:$0x1]
  %v1511 = vlaneseq
  %v1512 = vshrl.u32 %v1511, 7
  %v1513 = vsub.s32 0, %v1512
  %v1514 = vrot.slane %v1509, %v1513
  %v1517 = vsel %vm234, %v1497, 0
  %v1520 = vsel %vm234, %v1502, 0
  %1522 = vmatprep.subr.mxu0 0.0
  %1523 = vmatpush1.msra.mxu0 0.0
  %1524 = vmatprep.subr.mxu0 0.0
  %1525 = vmatpush1.msra.mxu0 0.0
  %1526 = vmatprep.subr.mxu0 0.0
  %1527 = vmatpush1.msra.mxu0 0.0
  %1528 = vmatprep.subr.mxu0 0.0
  %1529 = vmatpush1.msra.mxu0 0.0
  %1530 = vmatprep.subr.mxu0 0.0
  %1531 = vmatpush1.msra.mxu0 0.0
  %1532 = vmatprep.subr.mxu0 0.0
  %1533 = vmatpush1.msra.mxu0 0.0
  %1534 = vmatprep.subr.mxu0 0.0
  %1535 = vmatpush1.msra.mxu0 0.0
  %1536 = vmatprep.subr.mxu0 0.0
  %1537 = vmatpush1.msra.mxu0 0.0
  %1538 = vmatprep.subr.mxu0 0.0
  %1539 = vmatpush1.msra.mxu0 0.0
  %1540 = vmatprep.subr.mxu0 0.0
  %1541 = vmatpush1.msra.mxu0 0.0
  %1542 = vmatprep.subr.mxu0 0.0
  %1543 = vmatpush1.msra.mxu0 0.0
  %1544 = vmatprep.subr.mxu0 0.0
  %1545 = vmatpush1.msra.mxu0 0.0
  %1546 = vmatprep.subr.mxu0 0.0
  %1547 = vmatpush1.msra.mxu0 %v1508
  %1548 = vmatprep.subr.mxu0 0.0
  %1549 = vmatpush1.msra.mxu0 %v1507
  %1550 = vmatprep.subr.mxu0 0.0
  %1551 = vmatpush1.msra.mxu0 %v1506
  %1552 = vmatprep.subr.mxu0 0.0
  %1553 = vmatpush1.msra.mxu0 %v1505
  %1554 = vmatprep.subr.mxu0 0.0
  %1555 = vmatpush2.msra.mxu0 0.0
  %1556 = vmatprep.subr.mxu0 0.0
  %1557 = vmatpush2.msra.mxu0 0.0
  %1558 = vmatprep.subr.mxu0 0.0
  %1559 = vmatpush2.msra.mxu0 0.0
  %1560 = vmatprep.subr.mxu0 0.0
  %1561 = vmatpush2.msra.mxu0 0.0
  %1562 = vmatprep.subr.mxu0 0.0
  %1563 = vmatpush2.msra.mxu0 0.0
  %1564 = vmatprep.subr.mxu0 0.0
  %1565 = vmatpush2.msra.mxu0 0.0
  %1566 = vmatprep.subr.mxu0 0.0
  %1567 = vmatpush2.msra.mxu0 0.0
  %1568 = vmatprep.subr.mxu0 0.0
  %1569 = vmatpush2.msra.mxu0 0.0
  %1570 = vmatprep.subr.mxu0 0.0
  %1571 = vmatpush2.msra.mxu0 0.0
  %1572 = vmatprep.subr.mxu0 0.0
  %1573 = vmatpush2.msra.mxu0 0.0
  %1574 = vmatprep.subr.mxu0 0.0
  %1575 = vmatpush2.msra.mxu0 0.0
  %1576 = vmatprep.subr.mxu0 0.0
  %1577 = vmatpush2.msra.mxu0 0.0
  %1578 = vmatprep.subr.mxu0 0.0
  %1579 = vmatpush2.msra.mxu0 0.0
  %1580 = vmatprep.subr.mxu0 0.0
  %1581 = vmatpush2.msra.mxu0 0.0
  %1582 = vmatprep.subr.mxu0 0.0
  %1583 = vmatpush2.msra.mxu0 0.0
  %1584 = vmatprep.subr.mxu0 0.0
  %1585 = vmatpush2.msra.mxu0 0.0
  %1586 = vmatprep.mubr.f32.mxu0 0.0
  %1587 = vmatmul.mubr.f32.gmra.mxu0 %v1517
  %v1588 = vpop.f32.mrf.mxu0
  %v1589 = vadd.f32 %v1514, %v1588
  %v1590 = vpop.f32.mrf.mxu0
  %1591 = vmatprep.mubr.f32.mxu0 0.0
  %1592 = vmatmul.mubr.f32.gmra.mxu0 %v1520
  %v1593 = vpop.f32.mrf.mxu0
  %v1594 = vadd.f32 %v1514, %v1593
  %v1595 = vpop.f32.mrf.mxu0
  %1596 = vdwg.mxu0
  %v1597 = vmax.f32 %v1589, 0.0
  %v1598 = vmax.f32 %v1594, 0.0
  %v1599 = vld [vmem:[%s49] sm:$0xff]
  %v1600 = vld [vmem:[%s49 + $0x8] sm:$0xff]
  %v1601 = vld [vmem:[%s49 + $0x10] sm:$0xff]
  %v1602 = vld [vmem:[%s49 + $0x18] sm:$0xff]
  %v1603 = vld [vmem:[%s51] sm:$0x1]
  %v1605 = vlaneseq
  %v1606 = vshrl.u32 %v1605, 7
  %v1607 = vsub.s32 0, %v1606
  %v1608 = vrot.slane %v1603, %v1607
  %v1611 = vsel %vm234, %v1597, 0
  %v1614 = vsel %vm234, %v1598, 0
  %1616 = vmatprep.subr.mxu0 0.0
  %1617 = vmatpush1.msra.mxu0 0.0
  %1618 = vmatprep.subr.mxu0 0.0
  %1619 = vmatpush1.msra.mxu0 0.0
  %1620 = vmatprep.subr.mxu0 0.0
  %1621 = vmatpush1.msra.mxu0 0.0
  %1622 = vmatprep.subr.mxu0 0.0
  %1623 = vmatpush1.msra.mxu0 0.0
  %1624 = vmatprep.subr.mxu0 0.0
  %1625 = vmatpush1.msra.mxu0 0.0
  %1626 = vmatprep.subr.mxu0 0.0
  %1627 = vmatpush1.msra.mxu0 0.0
  %1628 = vmatprep.subr.mxu0 0.0
  %1629 = vmatpush1.msra.mxu0 0.0
  %1630 = vmatprep.subr.mxu0 0.0
  %1631 = vmatpush1.msra.mxu0 0.0
  %1632 = vmatprep.subr.mxu0 0.0
  %1633 = vmatpush1.msra.mxu0 0.0
  %1634 = vmatprep.subr.mxu0 0.0
  %1635 = vmatpush1.msra.mxu0 0.0
  %1636 = vmatprep.subr.mxu0 0.0
  %1637 = vmatpush1.msra.mxu0 0.0
  %1638 = vmatprep.subr.mxu0 0.0
  %1639 = vmatpush1.msra.mxu0 0.0
  %1640 = vmatprep.subr.mxu0 0.0
  %1641 = vmatpush1.msra.mxu0 %v1602
  %1642 = vmatprep.subr.mxu0 0.0
  %1643 = vmatpush1.msra.mxu0 %v1601
  %1644 = vmatprep.subr.mxu0 0.0
  %1645 = vmatpush1.msra.mxu0 %v1600
  %1646 = vmatprep.subr.mxu0 0.0
  %1647 = vmatpush1.msra.mxu0 %v1599
  %1648 = vmatprep.subr.mxu0 0.0
  %1649 = vmatpush2.msra.mxu0 0.0
  %1650 = vmatprep.subr.mxu0 0.0
  %1651 = vmatpush2.msra.mxu0 0.0
  %1652 = vmatprep.subr.mxu0 0.0
  %1653 = vmatpush2.msra.mxu0 0.0
  %1654 = vmatprep.subr.mxu0 0.0
  %1655 = vmatpush2.msra.mxu0 0.0
  %1656 = vmatprep.subr.mxu0 0.0
  %1657 = vmatpush2.msra.mxu0 0.0
  %1658 = vmatprep.subr.mxu0 0.0
  %1659 = vmatpush2.msra.mxu0 0.0
  %1660 = vmatprep.subr.mxu0 0.0
  %1661 = vmatpush2.msra.mxu0 0.0
  %1662 = vmatprep.subr.mxu0 0.0
  %1663 = vmatpush2.msra.mxu0 0.0
  %1664 = vmatprep.subr.mxu0 0.0
  %1665 = vmatpush2.msra.mxu0 0.0
  %1666 = vmatprep.subr.mxu0 0.0
  %1667 = vmatpush2.msra.mxu0 0.0
  %1668 = vmatprep.subr.mxu0 0.0
  %1669 = vmatpush2.msra.mxu0 0.0
  %1670 = vmatprep.subr.mxu0 0.0
  %1671 = vmatpush2.msra.mxu0 0.0
  %1672 = vmatprep.subr.mxu0 0.0
  %1673 = vmatpush2.msra.mxu0 0.0
  %1674 = vmatprep.subr.mxu0 0.0
  %1675 = vmatpush2.msra.mxu0 0.0
  %1676 = vmatprep.subr.mxu0 0.0
  %1677 = vmatpush2.msra.mxu0 0.0
  %1678 = vmatprep.subr.mxu0 0.0
  %1679 = vmatpush2.msra.mxu0 0.0
  %1680 = vmatprep.mubr.f32.mxu0 0.0
  %1681 = vmatmul.mubr.f32.gmra.mxu0 %v1611
  %v1682 = vpop.f32.mrf.mxu0
  %v1683 = vadd.f32 %v1608, %v1682
  %v1684 = vpop.f32.mrf.mxu0
  %1685 = vmatprep.mubr.f32.mxu0 0.0
  %1686 = vmatmul.mubr.f32.gmra.mxu0 %v1614
  %v1687 = vpop.f32.mrf.mxu0
  %v1688 = vadd.f32 %v1608, %v1687
  %v1689 = vpop.f32.mrf.mxu0
  %1690 = vdwg.mxu0
  %v1691 = vadd.f32 %v1683, %v1419
  %v1692 = vadd.f32 %v1688, %v1420
  %v1693 = vld [vmem:[%s53] sm:$0x3]
  %v1695 = vsel %vm1423, %v1693, 0
  %1697 = vmatprep.subr.mxu0 0.0
  %1698 = vmatpush1.msra.mxu0 0.0
  %1699 = vmatprep.subr.mxu0 0.0
  %1700 = vmatpush1.msra.mxu0 0.0
  %1701 = vmatprep.subr.mxu0 0.0
  %1702 = vmatpush1.msra.mxu0 0.0
  %1703 = vmatprep.subr.mxu0 0.0
  %1704 = vmatpush1.msra.mxu0 0.0
  %1705 = vmatprep.subr.mxu0 0.0
  %1706 = vmatpush1.msra.mxu0 0.0
  %1707 = vmatprep.subr.mxu0 0.0
  %1708 = vmatpush1.msra.mxu0 0.0
  %1709 = vmatprep.subr.mxu0 0.0
  %1710 = vmatpush1.msra.mxu0 0.0
  %1711 = vmatprep.subr.mxu0 0.0
  %1712 = vmatpush1.msra.mxu0 0.0
  %1713 = vmatprep.subr.mxu0 0.0
  %1714 = vmatpush1.msra.mxu0 0.0
  %1715 = vmatprep.subr.mxu0 0.0
  %1716 = vmatpush1.msra.mxu0 0.0
  %1717 = vmatprep.subr.mxu0 0.0
  %1718 = vmatpush1.msra.mxu0 0.0
  %1719 = vmatprep.subr.mxu0 0.0
  %1720 = vmatpush1.msra.mxu0 0.0
  %1721 = vmatprep.subr.mxu0 0.0
  %1722 = vmatpush1.msra.mxu0 0.0
  %1723 = vmatprep.subr.mxu0 0.0
  %1724 = vmatpush1.msra.mxu0 0.0
  %1725 = vmatprep.subr.mxu0 0.0
  %1726 = vmatpush1.msra.mxu0 %v1692
  %1727 = vmatprep.subr.mxu0 0.0
  %1728 = vmatpush1.msra.mxu0 %v1691
  %1729 = vmatprep.subr.mxu0 0.0
  %1730 = vmatpush2.msra.mxu0 0.0
  %1731 = vmatprep.subr.mxu0 0.0
  %1732 = vmatpush2.msra.mxu0 0.0
  %1733 = vmatprep.subr.mxu0 0.0
  %1734 = vmatpush2.msra.mxu0 0.0
  %1735 = vmatprep.subr.mxu0 0.0
  %1736 = vmatpush2.msra.mxu0 0.0
  %1737 = vmatprep.subr.mxu0 0.0
  %1738 = vmatpush2.msra.mxu0 0.0
  %1739 = vmatprep.subr.mxu0 0.0
  %1740 = vmatpush2.msra.mxu0 0.0
  %1741 = vmatprep.subr.mxu0 0.0
  %1742 = vmatpush2.msra.mxu0 0.0
  %1743 = vmatprep.subr.mxu0 0.0
  %1744 = vmatpush2.msra.mxu0 0.0
  %1745 = vmatprep.subr.mxu0 0.0
  %1746 = vmatpush2.msra.mxu0 0.0
  %1747 = vmatprep.subr.mxu0 0.0
  %1748 = vmatpush2.msra.mxu0 0.0
  %1749 = vmatprep.subr.mxu0 0.0
  %1750 = vmatpush2.msra.mxu0 0.0
  %1751 = vmatprep.subr.mxu0 0.0
  %1752 = vmatpush2.msra.mxu0 0.0
  %1753 = vmatprep.subr.mxu0 0.0
  %1754 = vmatpush2.msra.mxu0 0.0
  %1755 = vmatprep.subr.mxu0 0.0
  %1756 = vmatpush2.msra.mxu0 0.0
  %1757 = vmatprep.subr.mxu0 0.0
  %1758 = vmatpush2.msra.mxu0 0.0
  %1759 = vmatprep.subr.mxu0 0.0
  %1760 = vmatpush2.msra.mxu0 0.0
  %1761 = vmatprep.mubr.f32.mxu0 0.0
  %1762 = vmatmul.mubr.f32.gmra.mxu0 %v1695
  %v1763 = vpop.f32.mrf.mxu0
  %v1764 = vadd.f32 0.0, %v1763
  %v1765 = vpop.f32.mrf.mxu0
  %1766 = vdwg.mxu0
  %v1767 = vld [vmem:[%s55] sm:$0xff]
  %v1768 = vld [vmem:[%s55 + $0x8] sm:$0xff]
  %v1769 = vld [vmem:[%s55 + $0x10] sm:$0xff]
  %v1770 = vld [vmem:[%s55 + $0x18] sm:$0xff]
  %v1771 = vld [vmem:[#allocation2] sm:$0x1]
  %v1773 = vlaneseq
  %v1774 = vshrl.u32 %v1773, 7
  %v1775 = vsub.s32 0, %v1774
  %v1776 = vrot.slane %v1771, %v1775
  %v1779 = vsel %vm234, %v1764, 0
  %1781 = vmatprep.subr.mxu0 0.0
  %1782 = vmatpush1.msra.mxu0 0.0
  %1783 = vmatprep.subr.mxu0 0.0
  %1784 = vmatpush1.msra.mxu0 0.0
  %1785 = vmatprep.subr.mxu0 0.0
  %1786 = vmatpush1.msra.mxu0 0.0
  %1787 = vmatprep.subr.mxu0 0.0
  %1788 = vmatpush1.msra.mxu0 0.0
  %1789 = vmatprep.subr.mxu0 0.0
  %1790 = vmatpush1.msra.mxu0 0.0
  %1791 = vmatprep.subr.mxu0 0.0
  %1792 = vmatpush1.msra.mxu0 0.0
  %1793 = vmatprep.subr.mxu0 0.0
  %1794 = vmatpush1.msra.mxu0 0.0
  %1795 = vmatprep.subr.mxu0 0.0
  %1796 = vmatpush1.msra.mxu0 0.0
  %1797 = vmatprep.subr.mxu0 0.0
  %1798 = vmatpush1.msra.mxu0 0.0
  %1799 = vmatprep.subr.mxu0 0.0
  %1800 = vmatpush1.msra.mxu0 0.0
  %1801 = vmatprep.subr.mxu0 0.0
  %1802 = vmatpush1.msra.mxu0 0.0
  %1803 = vmatprep.subr.mxu0 0.0
  %1804 = vmatpush1.msra.mxu0 0.0
  %1805 = vmatprep.subr.mxu0 0.0
  %1806 = vmatpush1.msra.mxu0 %v1770
  %1807 = vmatprep.subr.mxu0 0.0
  %1808 = vmatpush1.msra.mxu0 %v1769
  %1809 = vmatprep.subr.mxu0 0.0
  %1810 = vmatpush1.msra.mxu0 %v1768
  %1811 = vmatprep.subr.mxu0 0.0
  %1812 = vmatpush1.msra.mxu0 %v1767
  %1813 = vmatprep.subr.mxu0 0.0
  %1814 = vmatpush2.msra.mxu0 0.0
  %1815 = vmatprep.subr.mxu0 0.0
  %1816 = vmatpush2.msra.mxu0 0.0
  %1817 = vmatprep.subr.mxu0 0.0
  %1818 = vmatpush2.msra.mxu0 0.0
  %1819 = vmatprep.subr.mxu0 0.0
  %1820 = vmatpush2.msra.mxu0 0.0
  %1821 = vmatprep.subr.mxu0 0.0
  %1822 = vmatpush2.msra.mxu0 0.0
  %1823 = vmatprep.subr.mxu0 0.0
  %1824 = vmatpush2.msra.mxu0 0.0
  %1825 = vmatprep.subr.mxu0 0.0
  %1826 = vmatpush2.msra.mxu0 0.0
  %1827 = vmatprep.subr.mxu0 0.0
  %1828 = vmatpush2.msra.mxu0 0.0
  %1829 = vmatprep.subr.mxu0 0.0
  %1830 = vmatpush2.msra.mxu0 0.0
  %1831 = vmatprep.subr.mxu0 0.0
  %1832 = vmatpush2.msra.mxu0 0.0
  %1833 = vmatprep.subr.mxu0 0.0
  %1834 = vmatpush2.msra.mxu0 0.0
  %1835 = vmatprep.subr.mxu0 0.0
  %1836 = vmatpush2.msra.mxu0 0.0
  %1837 = vmatprep.subr.mxu0 0.0
  %1838 = vmatpush2.msra.mxu0 0.0
  %1839 = vmatprep.subr.mxu0 0.0
  %1840 = vmatpush2.msra.mxu0 0.0
  %1841 = vmatprep.subr.mxu0 0.0
  %1842 = vmatpush2.msra.mxu0 0.0
  %1843 = vmatprep.subr.mxu0 0.0
  %1844 = vmatpush2.msra.mxu0 0.0
  %1845 = vmatprep.mubr.f32.mxu0 0.0
  %1846 = vmatmul.mubr.f32.gmra.mxu0 %v1779
  %v1847 = vpop.f32.mrf.mxu0
  %v1848 = vadd.f32 %v1776, %v1847
  %v1849 = vpop.f32.mrf.mxu0
  %1850 = vdwg.mxu0
  %vm1851 = vcmask 1024
  %1852 = vst.msk [vmem:[%s59] sm:$0x3] %vm1851, %v1848
  // Predicated region
  $region118: #{tpu_custom_call.1} parent=0 // pred_check
    _
  $region119: #{tpu_custom_call.1} parent=0 // pred_check_branch
    %1854 = sbr.rel (0) target = $region121
  $region120: #{tpu_custom_call.1} parent=0 // pred_region
    _
  $region121: #{tpu_custom_call.1} parent=0 // pred_fallthru
    _
  // Predicated region
  $region122: #{tpu_custom_call.1} parent=0 // pred_check
    _
  $region123: #{tpu_custom_call.1} parent=0 // pred_check_branch
    %1856 = sbr.rel (0) target = $region125
  $region124: #{tpu_custom_call.1} parent=0 // pred_region
    _
  $region125: #{tpu_custom_call.1} parent=0 // pred_fallthru
    _

</llo_original>
